<compile_context>
chip_gen: v7x
topology: tpu7x:2x2x1
jax: 0.10.0
libtpu: 0.0.40
codegen_flags: <defaults>
</compile_context>

<pallas_src>
import jax
import jax.numpy as jnp
from jax.experimental import pallas as pl
from jax.experimental.pallas import tpu as pltpu


def _round_up(x, m):
    return (x + m - 1) // m * m


# -----------------------------------------------------------------------------
# Kernel: one MXU dot per tile (patches @ phase_weights) + bias + ReLU, bf16 out
# -----------------------------------------------------------------------------
def _phase_conv_kernel(p_ref, w_ref, b_ref, o_ref):
    """p_ref : (1, tile_m, kp)        bf16  3x3xCin patches packed into lanes (zero padded)
       w_ref : (kp, 4*coutp)          bf16  per-phase effective 2x2 weights (resident)
       b_ref : (1, 4*coutp)           f32   bias tiled over the 4 upsample phases (resident)
       o_ref : (1, tile_m, 4*coutp)   bf16  4 phase outputs per source pixel
    """
    acc = jnp.dot(p_ref[0], w_ref[...], preferred_element_type=jnp.float32)
    acc = jnp.maximum(acc + b_ref[...], 0.0)          # f32 epilogue
    o_ref[...] = acc[None, :, :].astype(o_ref.dtype)  # single lane-dense bf16 store


# -----------------------------------------------------------------------------
# Wrapper-side packing helpers (plain JAX, tiny vs. the output tensor)
# -----------------------------------------------------------------------------
# phase row-parity -> source-offset index (0/1/2 == rows i-1/i/i+1) per conv tap dy
_SRC = {0: (0, 1, 1), 1: (1, 1, 2)}


def _pack_phase_weights(w, kp, coutp):
    """(Cout, Cin, 3, 3) -> (kp, 4*coutp). Column group g = 2*py+px holds the
    2x2-effective kernel of upsample phase (py, px); row = (a*3+b)*Cin + cin,
    where (a, b) index the 3x3 source neighborhood on the original grid."""
    cout, cin = w.shape[0], w.shape[1]
    w_hwio = jnp.transpose(w, (2, 3, 1, 0)).astype(jnp.float32)      # (3, 3, Cin, Cout)
    cols = []
    for py in (0, 1):
        for px in (0, 1):
            eff = jnp.zeros((3, 3, cin, cout), jnp.float32)
            for dy in range(3):
                for dx in range(3):
                    eff = eff.at[_SRC[py][dy], _SRC[px][dx]].add(w_hwio[dy, dx])
            eff = eff.reshape(9 * cin, cout)
            cols.append(jnp.pad(eff, ((0, kp - 9 * cin), (0, coutp - cout))))
    return jnp.concatenate(cols, axis=1).astype(jnp.bfloat16)        # (kp, 4*coutp)


def _im2col_3x3(x_nhwc, kp):
    """(N, H, W, Cin) -> (N, H*W, kp) bf16: zero-padded 3x3 neighborhoods,
    lane = (a*3 + b)*Cin + cin (must match _pack_phase_weights row order)."""
    n, h, w, cin = x_nhwc.shape
    xp = jnp.pad(x_nhwc, ((0, 0), (1, 1), (1, 1), (0, 0)))
    slabs = [xp[:, a:a + h, b:b + w, :] for a in range(3) for b in range(3)]
    p = jnp.concatenate(slabs, axis=-1)                              # (N, H, W, 9*Cin)
    p = jnp.pad(p, ((0, 0), (0, 0), (0, 0), (0, kp - 9 * cin)))
    return p.reshape(n, h * w, kp).astype(jnp.bfloat16)


def _pick_tile_m(mrows, out_cols, n_batch):
    """Pixel rows per grid step: multiple of 8, bf16 out-block <= ~2 MiB, and
    >=2 tiles per batch when batch is small (keeps store/compute overlapped)."""
    cap = max(8, ((2 << 20) // (out_cols * 2)) // 8 * 8)
    want_tiles = 1 if n_batch >= 4 else 2
    rows = _round_up(-(-mrows // want_tiles), 8)
    return max(8, min(cap, rows))


# -----------------------------------------------------------------------------
# Forward wrapper
# -----------------------------------------------------------------------------
def mask_up_block_forward(x, w, b, *, nchw_output=True):
    """relu(conv3x3_pad1(nearest_up2(x))).
    x: (N, Cin, H, W) f32, w: (Cout, Cin, 3, 3) f32, b: (Cout,) f32.
    Returns (N, Cout, 2H, 2W) f32 (PyTorch layout); with nchw_output=False the
    kernel-native (N, H, W, 2, 2, Cout) bf16 tensor is returned instead, where
    out[n, i, j, py, px, c] is the output at upsampled position (2i+py, 2j+px)."""
    n, cin, h, wdt = x.shape
    cout = w.shape[0]
    assert w.shape == (cout, cin, 3, 3) and b.shape == (cout,)

    # Note: lane-packing all 27 taps is the right call for this module's small
    # Cin (=3); for very large Cin the im2col would inflate HBM traffic 9x.
    kp = _round_up(9 * cin, 128)          # taps*Cin packed into the lane pad
    coutp = _round_up(cout, 128)
    ncols = 4 * coutp

    # ---- prep (plain JAX; ~6% of output bytes for Cin=3) --------------------
    x_nhwc = jnp.transpose(x, (0, 2, 3, 1))
    patches = _im2col_3x3(x_nhwc, kp)                       # (N, H*W, kp) bf16
    w_mat = _pack_phase_weights(w, kp, coutp)               # (kp, 4*coutp) bf16
    b_row = jnp.tile(jnp.pad(b.astype(jnp.float32), (0, coutp - cout)), 4)
    b_row = b_row.reshape(1, ncols)

    mrows = h * wdt
    tile_m = _pick_tile_m(mrows, ncols, n)
    mpad = _round_up(mrows, tile_m)
    if mpad != mrows:
        patches = jnp.pad(patches, ((0, 0), (0, mpad - mrows), (0, 0)))

    try:
        vmem_limit = int(pltpu.get_tpu_info().vmem_capacity_bytes * 3 // 4)
    except Exception:
        vmem_limit = 48 * 1024 * 1024     # safe on v5e/v6e (128 MiB) and v7x (64 MiB/TC)

    out = pl.pallas_call(
        _phase_conv_kernel,
        out_shape=jax.ShapeDtypeStruct((n, mpad, ncols), jnp.bfloat16),
        grid=(n, mpad // tile_m),
        in_specs=[
            pl.BlockSpec((1, tile_m, kp), lambda i, t: (i, t, 0)),
            pl.BlockSpec((kp, ncols), lambda i, t: (0, 0)),     # resident weights
            pl.BlockSpec((1, ncols), lambda i, t: (0, 0)),      # resident bias
        ],
        out_specs=pl.BlockSpec((1, tile_m, ncols), lambda i, t: (i, t, 0)),
        compiler_params=pltpu.CompilerParams(
            dimension_semantics=("parallel", "parallel"),
            vmem_limit_bytes=vmem_limit),
    )(patches, w_mat, b_row)

    out = out[:, :mrows, :].reshape(n, h, wdt, 2, 2, coutp)[..., :cout]
    if not nchw_output:
        return out                                              # (N, H, W, py, px, Cout) bf16
    out = jnp.transpose(out, (0, 5, 1, 3, 2, 4))                # (N, Cout, H, py, W, px)
    return out.reshape(n, cout, 2 * h, 2 * wdt).astype(jnp.float32)


# -----------------------------------------------------------------------------
# Parameters (deterministic; 1/sqrt(fan_in) scale, PyTorch-default-like)
# -----------------------------------------------------------------------------
def init_params(key, in_channel=3, out_channel=512):
    kw, kb = jax.random.split(key)
    fan_in = in_channel * 9
    w = jax.random.normal(kw, (out_channel, in_channel, 3, 3), jnp.float32) / (fan_in ** 0.5)
    b = 0.01 * jax.random.normal(kb, (out_channel,), jnp.float32)
    return {"w": w, "b": b}


# -----------------------------------------------------------------------------
if __name__ == "__main__":
    key = jax.random.PRNGKey(0)
    k_param, k_x = jax.random.split(key)

    # module defaults: in_channel=3, out_channel=512 ; small spatial size
    N, CIN, H, W = 2, 3, 16, 16
    COUT = 512
    params = init_params(k_param, CIN, COUT)
    x = jax.random.normal(k_x, (N, CIN, H, W), jnp.float32)

    fwd = jax.jit(mask_up_block_forward)
    out = fwd(x, params["w"], params["b"])
    jax.block_until_ready(out)
    assert out.shape == (N, COUT, 2 * H, 2 * W), out.shape

    # Reference: nearest-x2 + conv3x3(pad=1) + bias + ReLU at full precision
    # (input bf16-rounded to match kernel operand precision; kernel also stores
    # bf16 and uses bf16 phase-summed weights, hence the 2e-2 rel-to-max bound).
    xb = x.astype(jnp.bfloat16).astype(jnp.float32)
    xu = jnp.repeat(jnp.repeat(xb, 2, axis=2), 2, axis=3)
    ref = jax.lax.conv_general_dilated(
        xu, params["w"], window_strides=(1, 1), padding=((1, 1), (1, 1)),
        dimension_numbers=("NCHW", "OIHW", "NCHW"),
        precision=jax.lax.Precision.HIGHEST)
    ref = jnp.maximum(ref + params["b"][None, :, None, None], 0.0)

    err = float(jnp.max(jnp.abs(out - ref)))
    scale = float(jnp.max(jnp.abs(ref))) + 1e-6
    assert err / scale < 2e-2, (err, scale)
    print("KERNEL_OK")
</pallas_src>

<mosaic_0001>
module attributes {stable_mosaic.version = 11 : i64} {
  func.func @_phase_conv_kernel(%arg0: i32, %arg1: i32, %arg2: memref<1x128x128xbf16, #tpu.memory_space<vmem>>, %arg3: memref<128x2048xbf16, #tpu.memory_space<vmem>>, %arg4: memref<1x2048xf32, #tpu.memory_space<vmem>>, %arg5: memref<1x128x2048xbf16, #tpu.memory_space<vmem>>) attributes {dimension_semantics = [#tpu.dimension_semantics<parallel>, #tpu.dimension_semantics<parallel>], iteration_bounds = array<i64: 2, 2>, scalar_prefetch = 0 : i64, scratch_operands = 0 : i64, tpu.core_type = #tpu.core_type<tc>, window_params = [{transform_indices = @transform_0, window_bounds = array<i64: 1, 128, 128>}, {pipeline_mode = #tpu.pipeline_mode<synchronous>, transform_indices = @transform_1, window_bounds = array<i64: 128, 2048>}, {pipeline_mode = #tpu.pipeline_mode<synchronous>, transform_indices = @transform_2, window_bounds = array<i64: 1, 2048>}, {transform_indices = @transform_3, window_bounds = array<i64: 1, 128, 2048>}]} {
    %c0 = arith.constant 0 : index
    %c0_0 = arith.constant 0 : index
    %c0_1 = arith.constant 0 : index
    %0 = vector.load %arg2[%c0, %c0_0, %c0_1] : memref<1x128x128xbf16, #tpu.memory_space<vmem>>, vector<1x128x128xbf16>
    %1 = vector.shape_cast %0 : vector<1x128x128xbf16> to vector<128x128xbf16>
    %c0_2 = arith.constant 0 : index
    %c0_3 = arith.constant 0 : index
    %2 = vector.load %arg3[%c0_2, %c0_3] : memref<128x2048xbf16, #tpu.memory_space<vmem>>, vector<128x2048xbf16>
    %cst = arith.constant dense<0.000000e+00> : vector<128x2048xf32>
    %3 = tpu.matmul %1, %2, %cst {dimension_numbers = #tpu.dot_dimension_numbers<[1], [0], [0], [1], [0, 0, 1, 1], [], []>} : vector<128x128xbf16>, vector<128x2048xbf16>, vector<128x2048xf32> -> vector<128x2048xf32>
    %c0_4 = arith.constant 0 : index
    %c0_5 = arith.constant 0 : index
    %4 = vector.load %arg4[%c0_4, %c0_5] : memref<1x2048xf32, #tpu.memory_space<vmem>>, vector<1x2048xf32>
    %5 = vector.broadcast %4 : vector<1x2048xf32> to vector<128x2048xf32>
    %6 = arith.addf %3, %5 : vector<128x2048xf32>
    %cst_6 = arith.constant 0.000000e+00 : f32
    %7 = vector.broadcast %cst_6 : f32 to vector<128x2048xf32>
    %8 = arith.maximumf %6, %7 : vector<128x2048xf32>
    %9 = vector.shape_cast %8 : vector<128x2048xf32> to vector<1x128x2048xf32>
    %10 = arith.truncf %9 : vector<1x128x2048xf32> to vector<1x128x2048xbf16>
    %c0_7 = arith.constant 0 : index
    %c0_8 = arith.constant 0 : index
    %c0_9 = arith.constant 0 : index
    %11 = vector.load %arg5[%c0_7, %c0_8, %c0_9] : memref<1x128x2048xbf16, #tpu.memory_space<vmem>>, vector<1x128x2048xbf16>
    tpu.vector_store %arg5[%c0_7, %c0_8, %c0_9], %10 {strides = array<i32>} : memref<1x128x2048xbf16, #tpu.memory_space<vmem>>, vector<1x128x2048xbf16>,
    return
  }
  func.func @transform_0(%arg0: i32, %arg1: i32) -> (i32, i32, i32) {
    %c0_i32 = arith.constant 0 : i32
    %c0_i32_0 = arith.constant 0 : i32
    return %arg0, %arg1, %c0_i32 : i32, i32, i32
  }
  func.func @transform_1(%arg0: i32, %arg1: i32) -> (i32, i32) {
    %c0_i32 = arith.constant 0 : i32
    %c0_i32_0 = arith.constant 0 : i32
    %c0_i32_1 = arith.constant 0 : i32
    return %c0_i32, %c0_i32_0 : i32, i32
  }
  func.func @transform_2(%arg0: i32, %arg1: i32) -> (i32, i32) {
    %c0_i32 = arith.constant 0 : i32
    %c0_i32_0 = arith.constant 0 : i32
    %c0_i32_1 = arith.constant 0 : i32
    return %c0_i32, %c0_i32_0 : i32, i32
  }
  func.func @transform_3(%arg0: i32, %arg1: i32) -> (i32, i32, i32) {
    %c0_i32 = arith.constant 0 : i32
    %c0_i32_0 = arith.constant 0 : i32
    return %arg0, %arg1, %c0_i32 : i32, i32, i32
  }
}

</mosaic_0001>

<llo_original>
// kernel: mask_up_block_forward.1
$region0: #{mask_up_block_forward.1}
  #allocation0 [shape = 'u32[]', space=smem, size = 0x4, offset = 0x4, fixed_abs, tag = 'smem constant byte address 0x4 - core index']
  #allocation1 [shape = 'u32[144,128]{1,0:T(1,128)}', space=vmem, size = 0x12000, scoped, tag = 'internal scratch']
  %s0 = inlined_call_operand.vmem [shape: bf16[2,256,128], index: 0, kind: input, shape index: {}]
  %s1 = inlined_call_operand.vmem [shape: bf16[128,2048], index: 1, kind: input, shape index: {}]
  %s2 = inlined_call_operand.vmem [shape: f32[1,2048], index: 2, kind: input, shape index: {}]
  %s3 = inlined_call_operand.vmem [shape: bf16[2,256,2048], index: 3, kind: output, shape index: {}]
  %s4 = sld [smem:[#allocation0]]
  $region45: #{mask_up_block_forward.1} parent=0
    _
  %s6 = ssub.s32 1, %s4
  %s7 = scalar_select 0, %s6, %s4
  loop: start=0, step=1, limit=6
  $region2: #{mask_up_block_forward.1} parent=0 // loop_pre_header
    _
  $region3: #{mask_up_block_forward.1} parent=0 // loop_header
    %s9 = sphi 0, %s13
    %p10 = scmp.ge.s32.totalorder %s9, 6
    %s16 = sphi 0, %s28
    %s17 = sphi 0, %s24
    %s18 = sphi 0, %s16
    %s19 = sphi 0, %s17
    %s20 = sphi 0, %s18
    %s21 = sphi 0, %s19
    %s33 = sphi 0, %s35
    %s36 = sphi 0, %s33
    %s37 = sphi 0, %s36
    %s53 = sphi 0, %s37
    %s57 = sphi 0, %s57
    %s59 = sphi 0, %s57
    %s60 = sphi 0, %s59
    %s74 = sphi 0, %s60
    %s78 = sphi 0, %s78
    %s80 = sphi 0, %s78
    %s81 = sphi 0, %s80
    %s95 = sphi 0, %s81
    %s103 = sphi 0, %s105
    %s106 = sphi 0, %s103
    %s107 = sphi 0, %s106
    %s123 = sphi 0, %s107
  $region4: #{mask_up_block_forward.1} parent=0 // loop_header_branch
    %12 = sbr.rel (%p10) target = $region8
  $region5: #{mask_up_block_forward.1} parent=0 // loop_body
    %s14 = ssub.s32 %s9, 1
    %s15 = ssub.s32 %s9, 2
    %s22 = sadd.s32 1, %s17
    %p23 = scmp.ge.s32.totalorder %s22, 2
    %s24 = scalar_select %p23, 0, %s22
    %s25 = sadd.s32 1, %s16
    %s26 = scalar_select %p23, %s25, %s16
    %p27 = scmp.ge.s32.totalorder %s26, 2
    %s28 = scalar_select %p27, 0, %s26
    %s29 = ssub.s32 %s16, %s28
    %s30 = ssub.s32 %s17, %s24
    %s31 = sor.u32 %s29, %s30
    %p32 = scmp.eq.s32.totalorder %s31, 0
    %s34 = sadd.s32 %s33, 1
    %s35 = scalar_select %p32, %s33, %s34
    %p38 = pneg %p32
    %p39 = scmp.eq.s32.totalorder %s9, 3
    %p40 = por %p38, %p39
    %p41 = scmp.ne.s32.totalorder %s33, %s36
    %p42 = scmp.eq.s32.totalorder %s9, 0
    %p43 = por %p41, %p42
    %p44 = scmp.ne.s32.totalorder %s33, %s36
    %p45 = scmp.eq.s32.totalorder %s14, 3
    %p46 = por %p44, %p45
    %p47 = scmp.ne.s32.totalorder %s36, %s37
    %p48 = scmp.eq.s32.totalorder %s14, 0
    %p49 = por %p47, %p48
    %p50 = scmp.ne.s32.totalorder %s36, %s37
    %p51 = scmp.eq.s32.totalorder %s15, 3
    %p52 = por %p50, %p51
    %p54 = scmp.ne.s32.totalorder %s37, %s53
    %p55 = scmp.eq.s32.totalorder %s15, 0
    %p56 = por %p54, %p55
    %s58 = sadd.s32 %s57, 1
    %p61 = scmp.eq.s32.totalorder %s9, 3
    %p62 = scmp.ne.s32.totalorder %s57, %s59
    %p63 = scmp.eq.s32.totalorder %s9, 0
    %p64 = por %p62, %p63
    %p65 = scmp.ne.s32.totalorder %s57, %s59
    %p66 = scmp.eq.s32.totalorder %s14, 3
    %p67 = por %p65, %p66
    %p68 = scmp.ne.s32.totalorder %s59, %s60
    %p69 = scmp.eq.s32.totalorder %s14, 0
    %p70 = por %p68, %p69
    %p71 = scmp.ne.s32.totalorder %s59, %s60
    %p72 = scmp.eq.s32.totalorder %s15, 3
    %p73 = por %p71, %p72
    %p75 = scmp.ne.s32.totalorder %s60, %s74
    %p76 = scmp.eq.s32.totalorder %s15, 0
    %p77 = por %p75, %p76
    %s79 = sadd.s32 %s78, 1
    %p82 = scmp.eq.s32.totalorder %s9, 3
    %p83 = scmp.ne.s32.totalorder %s78, %s80
    %p84 = scmp.eq.s32.totalorder %s9, 0
    %p85 = por %p83, %p84
    %p86 = scmp.ne.s32.totalorder %s78, %s80
    %p87 = scmp.eq.s32.totalorder %s14, 3
    %p88 = por %p86, %p87
    %p89 = scmp.ne.s32.totalorder %s80, %s81
    %p90 = scmp.eq.s32.totalorder %s14, 0
    %p91 = por %p89, %p90
    %p92 = scmp.ne.s32.totalorder %s80, %s81
    %p93 = scmp.eq.s32.totalorder %s15, 3
    %p94 = por %p92, %p93
    %p96 = scmp.ne.s32.totalorder %s81, %s95
    %p97 = scmp.eq.s32.totalorder %s15, 0
    %p98 = por %p96, %p97
    %s99 = ssub.s32 %s16, %s28
    %s100 = ssub.s32 %s17, %s24
    %s101 = sor.u32 %s99, %s100
    %p102 = scmp.eq.s32.totalorder %s101, 0
    %s104 = sadd.s32 %s103, 1
    %s105 = scalar_select %p102, %s103, %s104
    %p108 = pneg %p102
    %p109 = scmp.eq.s32.totalorder %s9, 3
    %p110 = por %p108, %p109
    %p111 = scmp.ne.s32.totalorder %s103, %s106
    %p112 = scmp.eq.s32.totalorder %s9, 0
    %p113 = por %p111, %p112
    %p114 = scmp.ne.s32.totalorder %s103, %s106
    %p115 = scmp.eq.s32.totalorder %s14, 3
    %p116 = por %p114, %p115
    %p117 = scmp.ne.s32.totalorder %s106, %s107
    %p118 = scmp.eq.s32.totalorder %s14, 0
    %p119 = por %p117, %p118
    %p120 = scmp.ne.s32.totalorder %s106, %s107
    %p121 = scmp.eq.s32.totalorder %s15, 3
    %p122 = por %p120, %p121
    %p124 = scmp.ne.s32.totalorder %s107, %s123
    %p125 = scmp.eq.s32.totalorder %s15, 0
    %p126 = por %p124, %p125
    %p127 = scmp.le.s32.totalorder 1, %s9
    %p128 = scmp.lt.s32.totalorder %s9, 5
    %p129 = pnand %p127, %p128
    %p130 = pneg %p129
    // Predicated region
    $region9: #{mask_up_block_forward.1} parent=5 // pred_check
      _
    $region10: #{mask_up_block_forward.1} parent=5 // pred_check_branch
      %132 = sbr.rel (%p129) target = $region12
    $region11: #{mask_up_block_forward.1} parent=5 // pred_region
      %s133 = ssub.s32 %s9, 1
      // Predicated region
      $region13: #{mask_up_block_forward.1} parent=11 // pred_check
        %p134 = pneg %p70
      $region14: #{mask_up_block_forward.1} parent=11 // pred_check_branch
        %136 = sbr.rel (%p134) target = $region16
      $region15: #{mask_up_block_forward.1} parent=11 // pred_region
        _
      $region16: #{mask_up_block_forward.1} parent=11 // pred_fallthru
        _
      // Predicated region
      $region17: #{mask_up_block_forward.1} parent=11 // pred_check
        %p137 = pneg %p91
      $region18: #{mask_up_block_forward.1} parent=11 // pred_check_branch
        %139 = sbr.rel (%p137) target = $region20
      $region19: #{mask_up_block_forward.1} parent=11 // pred_region
        _
      $region20: #{mask_up_block_forward.1} parent=11 // pred_fallthru
        _
    $region12: #{mask_up_block_forward.1} parent=5 // pred_fallthru
      _
    %p140 = scmp.lt.s32.totalorder %s9, 4
    // Predicated region
    $region21: #{mask_up_block_forward.1} parent=5 // pred_check
      %p141 = pneg %p140
    $region22: #{mask_up_block_forward.1} parent=5 // pred_check_branch
      %143 = sbr.rel (%p141) target = $region24
    $region23: #{mask_up_block_forward.1} parent=5 // pred_region
      // Predicated region
      $region25: #{mask_up_block_forward.1} parent=23 // pred_check
        %p144 = pneg %p43
      $region26: #{mask_up_block_forward.1} parent=23 // pred_check_branch
        %146 = sbr.rel (%p144) target = $region28
      $region27: #{mask_up_block_forward.1} parent=23 // pred_region
        %s147 = smul.u32 16, %s17
        %p148 = scmp.lt.s32.totalorder %s16, 1
        %s149 = scalar_select %p148, %s16, 1
        %p150 = scmp.lt.s32.totalorder %s147, 31
        %s151 = scalar_select %p150, %s147, 31
        %s152 = smul.addr %s149, 32
        %s153 = sadd.s32 %s151, %s152
        %s154 = smul.addr %s153, 4
        %s155 = scalar_lea.vmem %s0, %s154
        %s156 = smul.u32 16, %s17
      $region28: #{mask_up_block_forward.1} parent=23 // pred_fallthru
        _
    $region24: #{mask_up_block_forward.1} parent=5 // pred_fallthru
      _
    %p157 = scmp.le.s32.totalorder 1, %s9
    %p158 = scmp.lt.s32.totalorder %s9, 5
    %p159 = pnand %p157, %p158
    %p160 = pneg %p159
    // Predicated region
    $region29: #{mask_up_block_forward.1} parent=5 // pred_check
      _
    $region30: #{mask_up_block_forward.1} parent=5 // pred_check_branch
      %162 = sbr.rel (%p159) target = $region32
    $region31: #{mask_up_block_forward.1} parent=5 // pred_region
      %s163 = ssub.s32 %s9, 1
      %s164 = smul.u32 16, %s19
      %p165 = scmp.lt.s32.totalorder %s18, 1
      %s166 = scalar_select %p165, %s18, 1
      %p167 = scmp.lt.s32.totalorder %s164, 31
      %s168 = scalar_select %p167, %s164, 31
      %s169 = smul.addr %s166, 32
      %s170 = sadd.s32 %s168, %s169
      %s171 = smul.addr %s170, 4
      %s172 = scalar_lea.vmem %s0, %s171
      %p173 = pneg %p49
      %p174 = pneg %p46
      %p175 = pneg %p70
      %p176 = pneg %p67
      %p177 = pneg %p91
      %p178 = pneg %p88
      %p179 = pneg %p119
      %p180 = pneg %p116
      %s181 = smul.u32 16, %s19
      %p182 = scmp.lt.s32.totalorder %s18, 1
      %s183 = scalar_select %p182, %s18, 1
      %p184 = scmp.lt.s32.totalorder %s181, 31
      %s185 = scalar_select %p184, %s181, 31
      %s186 = smul.addr %s185, 16
      %s187 = smul.addr %s183, 512
      %s188 = sadd.s32 %s186, %s187
      %s189 = smul.addr %s188, 4
      %s190 = scalar_lea.vmem %s3, %s189
      %s191 = smul.u32 16, %s19
      %p192 = scmp.lt.s32.totalorder %s18, 1
      %s193 = scalar_select %p192, %s18, 1
      %p194 = scmp.lt.s32.totalorder %s191, 31
      %s195 = scalar_select %p194, %s191, 31
      %s196 = smul.addr %s193, 32
      %s197 = sadd.s32 %s195, %s196
      %s198 = smul.addr %s197, 4
      %s199 = scalar_lea.vmem %s0, %s198
      %s200 = smul.u32 16, %s19
      %s201 = smul.u32 16, %s19
      %p202 = scmp.lt.s32.totalorder %s18, 1
      %s203 = scalar_select %p202, %s18, 1
      %p204 = scmp.lt.s32.totalorder %s201, 31
      %s205 = scalar_select %p204, %s201, 31
      %s206 = smul.addr %s205, 16
      %s207 = smul.addr %s203, 512
      %s208 = sadd.s32 %s206, %s207
      %s209 = smul.addr %s208, 4
      %s210 = scalar_lea.vmem %s3, %s209
      %s211 = smul.u32 16, %s19
      %v213 = vld [vmem:[%s199] sm:$0xf]
      %v214 = vld [vmem:[%s199 + $0x4] sm:$0xf]
      %v215 = vld [vmem:[%s199 + $0x8] sm:$0xf]
      %v216 = vld [vmem:[%s199 + $0xc] sm:$0xf]
      %v217 = vld [vmem:[%s199 + $0x10] sm:$0xf]
      %v218 = vld [vmem:[%s199 + $0x14] sm:$0xf]
      %v219 = vld [vmem:[%s199 + $0x18] sm:$0xf]
      %v220 = vld [vmem:[%s199 + $0x1c] sm:$0xf]
      %v221 = vld [vmem:[%s199 + $0x20] sm:$0xf]
      %v222 = vld [vmem:[%s199 + $0x24] sm:$0xf]
      %v223 = vld [vmem:[%s199 + $0x28] sm:$0xf]
      %v224 = vld [vmem:[%s199 + $0x2c] sm:$0xf]
      %v225 = vld [vmem:[%s199 + $0x30] sm:$0xf]
      %v226 = vld [vmem:[%s199 + $0x34] sm:$0xf]
      %v227 = vld [vmem:[%s199 + $0x38] sm:$0xf]
      %v228 = vld [vmem:[%s199 + $0x3c] sm:$0xf]
      %v229 = vld [vmem:[%s1] sm:$0xff]
      %v230 = vld [vmem:[%s1 + $0x8] sm:$0xff]
      %v231 = vld [vmem:[%s1 + $0x10] sm:$0xff]
      %v232 = vld [vmem:[%s1 + $0x18] sm:$0xff]
      %v233 = vld [vmem:[%s1 + $0x20] sm:$0xff]
      %v234 = vld [vmem:[%s1 + $0x28] sm:$0xff]
      %v235 = vld [vmem:[%s1 + $0x30] sm:$0xff]
      %v236 = vld [vmem:[%s1 + $0x38] sm:$0xff]
      %v237 = vld [vmem:[%s1 + $0x40] sm:$0xff]
      %v238 = vld [vmem:[%s1 + $0x48] sm:$0xff]
      %v239 = vld [vmem:[%s1 + $0x50] sm:$0xff]
      %v240 = vld [vmem:[%s1 + $0x58] sm:$0xff]
      %v241 = vld [vmem:[%s1 + $0x60] sm:$0xff]
      %v242 = vld [vmem:[%s1 + $0x68] sm:$0xff]
      %v243 = vld [vmem:[%s1 + $0x70] sm:$0xff]
      %v244 = vld [vmem:[%s1 + $0x78] sm:$0xff]
      %v245 = vld [vmem:[%s1 + $0x80] sm:$0xff]
      %v246 = vld [vmem:[%s1 + $0x88] sm:$0xff]
      %v247 = vld [vmem:[%s1 + $0x90] sm:$0xff]
      %v248 = vld [vmem:[%s1 + $0x98] sm:$0xff]
      %v249 = vld [vmem:[%s1 + $0xa0] sm:$0xff]
      %v250 = vld [vmem:[%s1 + $0xa8] sm:$0xff]
      %v251 = vld [vmem:[%s1 + $0xb0] sm:$0xff]
      %v252 = vld [vmem:[%s1 + $0xb8] sm:$0xff]
      %v253 = vld [vmem:[%s1 + $0xc0] sm:$0xff]
      %v254 = vld [vmem:[%s1 + $0xc8] sm:$0xff]
      %v255 = vld [vmem:[%s1 + $0xd0] sm:$0xff]
      %v256 = vld [vmem:[%s1 + $0xd8] sm:$0xff]
      %v257 = vld [vmem:[%s1 + $0xe0] sm:$0xff]
      %v258 = vld [vmem:[%s1 + $0xe8] sm:$0xff]
      %v259 = vld [vmem:[%s1 + $0xf0] sm:$0xff]
      %v260 = vld [vmem:[%s1 + $0xf8] sm:$0xff]
      %v261 = vld [vmem:[%s1 + $0x100] sm:$0xff]
      %v262 = vld [vmem:[%s1 + $0x108] sm:$0xff]
      %v263 = vld [vmem:[%s1 + $0x110] sm:$0xff]
      %v264 = vld [vmem:[%s1 + $0x118] sm:$0xff]
      %v265 = vld [vmem:[%s1 + $0x120] sm:$0xff]
      %v266 = vld [vmem:[%s1 + $0x128] sm:$0xff]
      %v267 = vld [vmem:[%s1 + $0x130] sm:$0xff]
      %v268 = vld [vmem:[%s1 + $0x138] sm:$0xff]
      %v269 = vld [vmem:[%s1 + $0x140] sm:$0xff]
      %v270 = vld [vmem:[%s1 + $0x148] sm:$0xff]
      %v271 = vld [vmem:[%s1 + $0x150] sm:$0xff]
      %v272 = vld [vmem:[%s1 + $0x158] sm:$0xff]
      %v273 = vld [vmem:[%s1 + $0x160] sm:$0xff]
      %v274 = vld [vmem:[%s1 + $0x168] sm:$0xff]
      %v275 = vld [vmem:[%s1 + $0x170] sm:$0xff]
      %v276 = vld [vmem:[%s1 + $0x178] sm:$0xff]
      %v277 = vld [vmem:[%s1 + $0x180] sm:$0xff]
      %v278 = vld [vmem:[%s1 + $0x188] sm:$0xff]
      %v279 = vld [vmem:[%s1 + $0x190] sm:$0xff]
      %v280 = vld [vmem:[%s1 + $0x198] sm:$0xff]
      %v281 = vld [vmem:[%s1 + $0x1a0] sm:$0xff]
      %v282 = vld [vmem:[%s1 + $0x1a8] sm:$0xff]
      %v283 = vld [vmem:[%s1 + $0x1b0] sm:$0xff]
      %v284 = vld [vmem:[%s1 + $0x1b8] sm:$0xff]
      %v285 = vld [vmem:[%s1 + $0x1c0] sm:$0xff]
      %v286 = vld [vmem:[%s1 + $0x1c8] sm:$0xff]
      %v287 = vld [vmem:[%s1 + $0x1d0] sm:$0xff]
      %v288 = vld [vmem:[%s1 + $0x1d8] sm:$0xff]
      %v289 = vld [vmem:[%s1 + $0x1e0] sm:$0xff]
      %v290 = vld [vmem:[%s1 + $0x1e8] sm:$0xff]
      %v291 = vld [vmem:[%s1 + $0x1f0] sm:$0xff]
      %v292 = vld [vmem:[%s1 + $0x1f8] sm:$0xff]
      %v293 = vld [vmem:[%s1 + $0x200] sm:$0xff]
      %v294 = vld [vmem:[%s1 + $0x208] sm:$0xff]
      %v295 = vld [vmem:[%s1 + $0x210] sm:$0xff]
      %v296 = vld [vmem:[%s1 + $0x218] sm:$0xff]
      %v297 = vld [vmem:[%s1 + $0x220] sm:$0xff]
      %v298 = vld [vmem:[%s1 + $0x228] sm:$0xff]
      %v299 = vld [vmem:[%s1 + $0x230] sm:$0xff]
      %v300 = vld [vmem:[%s1 + $0x238] sm:$0xff]
      %v301 = vld [vmem:[%s1 + $0x240] sm:$0xff]
      %v302 = vld [vmem:[%s1 + $0x248] sm:$0xff]
      %v303 = vld [vmem:[%s1 + $0x250] sm:$0xff]
      %v304 = vld [vmem:[%s1 + $0x258] sm:$0xff]
      %v305 = vld [vmem:[%s1 + $0x260] sm:$0xff]
      %v306 = vld [vmem:[%s1 + $0x268] sm:$0xff]
      %v307 = vld [vmem:[%s1 + $0x270] sm:$0xff]
      %v308 = vld [vmem:[%s1 + $0x278] sm:$0xff]
      %v309 = vld [vmem:[%s1 + $0x280] sm:$0xff]
      %v310 = vld [vmem:[%s1 + $0x288] sm:$0xff]
      %v311 = vld [vmem:[%s1 + $0x290] sm:$0xff]
      %v312 = vld [vmem:[%s1 + $0x298] sm:$0xff]
      %v313 = vld [vmem:[%s1 + $0x2a0] sm:$0xff]
      %v314 = vld [vmem:[%s1 + $0x2a8] sm:$0xff]
      %v315 = vld [vmem:[%s1 + $0x2b0] sm:$0xff]
      %v316 = vld [vmem:[%s1 + $0x2b8] sm:$0xff]
      %v317 = vld [vmem:[%s1 + $0x2c0] sm:$0xff]
      %v318 = vld [vmem:[%s1 + $0x2c8] sm:$0xff]
      %v319 = vld [vmem:[%s1 + $0x2d0] sm:$0xff]
      %v320 = vld [vmem:[%s1 + $0x2d8] sm:$0xff]
      %v321 = vld [vmem:[%s1 + $0x2e0] sm:$0xff]
      %v322 = vld [vmem:[%s1 + $0x2e8] sm:$0xff]
      %v323 = vld [vmem:[%s1 + $0x2f0] sm:$0xff]
      %v324 = vld [vmem:[%s1 + $0x2f8] sm:$0xff]
      %v325 = vld [vmem:[%s1 + $0x300] sm:$0xff]
      %v326 = vld [vmem:[%s1 + $0x308] sm:$0xff]
      %v327 = vld [vmem:[%s1 + $0x310] sm:$0xff]
      %v328 = vld [vmem:[%s1 + $0x318] sm:$0xff]
      %v329 = vld [vmem:[%s1 + $0x320] sm:$0xff]
      %v330 = vld [vmem:[%s1 + $0x328] sm:$0xff]
      %v331 = vld [vmem:[%s1 + $0x330] sm:$0xff]
      %v332 = vld [vmem:[%s1 + $0x338] sm:$0xff]
      %v333 = vld [vmem:[%s1 + $0x340] sm:$0xff]
      %v334 = vld [vmem:[%s1 + $0x348] sm:$0xff]
      %v335 = vld [vmem:[%s1 + $0x350] sm:$0xff]
      %v336 = vld [vmem:[%s1 + $0x358] sm:$0xff]
      %v337 = vld [vmem:[%s1 + $0x360] sm:$0xff]
      %v338 = vld [vmem:[%s1 + $0x368] sm:$0xff]
      %v339 = vld [vmem:[%s1 + $0x370] sm:$0xff]
      %v340 = vld [vmem:[%s1 + $0x378] sm:$0xff]
      %v341 = vld [vmem:[%s1 + $0x380] sm:$0xff]
      %v342 = vld [vmem:[%s1 + $0x388] sm:$0xff]
      %v343 = vld [vmem:[%s1 + $0x390] sm:$0xff]
      %v344 = vld [vmem:[%s1 + $0x398] sm:$0xff]
      %v345 = vld [vmem:[%s1 + $0x3a0] sm:$0xff]
      %v346 = vld [vmem:[%s1 + $0x3a8] sm:$0xff]
      %v347 = vld [vmem:[%s1 + $0x3b0] sm:$0xff]
      %v348 = vld [vmem:[%s1 + $0x3b8] sm:$0xff]
      %v349 = vld [vmem:[%s1 + $0x3c0] sm:$0xff]
      %v350 = vld [vmem:[%s1 + $0x3c8] sm:$0xff]
      %v351 = vld [vmem:[%s1 + $0x3d0] sm:$0xff]
      %v352 = vld [vmem:[%s1 + $0x3d8] sm:$0xff]
      %v353 = vld [vmem:[%s1 + $0x3e0] sm:$0xff]
      %v354 = vld [vmem:[%s1 + $0x3e8] sm:$0xff]
      %v355 = vld [vmem:[%s1 + $0x3f0] sm:$0xff]
      %v356 = vld [vmem:[%s1 + $0x3f8] sm:$0xff]
      %v357 = vld [vmem:[%s2] sm:$0xff]
      %v358 = vld [vmem:[%s2 + $0x8] sm:$0xff]
      %v361 = vlaneseq
      %v362 = vshrl.u32 %v361, 7
      %v363 = vsub.s32 0, %v362
      %v364 = vrot.slane %v357, %v363
      %v365 = vlaneseq
      %v366 = vshrl.u32 %v365, 7
      %v367 = vsub.s32 1, %v366
      %v368 = vrot.slane %v357, %v367
      %v369 = vlaneseq
      %v370 = vshrl.u32 %v369, 7
      %v371 = vsub.s32 2, %v370
      %v372 = vrot.slane %v357, %v371
      %v373 = vlaneseq
      %v374 = vshrl.u32 %v373, 7
      %v375 = vsub.s32 3, %v374
      %v376 = vrot.slane %v357, %v375
      %v377 = vlaneseq
      %v378 = vshrl.u32 %v377, 7
      %v379 = vsub.s32 4, %v378
      %v380 = vrot.slane %v357, %v379
      %v381 = vlaneseq
      %v382 = vshrl.u32 %v381, 7
      %v383 = vsub.s32 5, %v382
      %v384 = vrot.slane %v357, %v383
      %v385 = vlaneseq
      %v386 = vshrl.u32 %v385, 7
      %v387 = vsub.s32 6, %v386
      %v388 = vrot.slane %v357, %v387
      %v389 = vlaneseq
      %v390 = vshrl.u32 %v389, 7
      %v391 = vsub.s32 7, %v390
      %v392 = vrot.slane %v357, %v391
      %v393 = vlaneseq
      %v394 = vshrl.u32 %v393, 7
      %v395 = vsub.s32 0, %v394
      %v396 = vrot.slane %v358, %v395
      %v397 = vlaneseq
      %v398 = vshrl.u32 %v397, 7
      %v399 = vsub.s32 1, %v398
      %v400 = vrot.slane %v358, %v399
      %v401 = vlaneseq
      %v402 = vshrl.u32 %v401, 7
      %v403 = vsub.s32 2, %v402
      %v404 = vrot.slane %v358, %v403
      %v405 = vlaneseq
      %v406 = vshrl.u32 %v405, 7
      %v407 = vsub.s32 3, %v406
      %v408 = vrot.slane %v358, %v407
      %v409 = vlaneseq
      %v410 = vshrl.u32 %v409, 7
      %v411 = vsub.s32 4, %v410
      %v412 = vrot.slane %v358, %v411
      %v413 = vlaneseq
      %v414 = vshrl.u32 %v413, 7
      %v415 = vsub.s32 5, %v414
      %v416 = vrot.slane %v358, %v415
      %v417 = vlaneseq
      %v418 = vshrl.u32 %v417, 7
      %v419 = vsub.s32 6, %v418
      %v420 = vrot.slane %v358, %v419
      %v421 = vlaneseq
      %v422 = vshrl.u32 %v421, 7
      %v423 = vsub.s32 7, %v422
      %v424 = vrot.slane %v358, %v423
      %v457 = vunpack.c.l.b16 %v213
      %v458 = vunpack.c.l.b16 %v214
      %v459 = vunpack.c.l.b16 %v215
      %v460 = vunpack.c.l.b16 %v216
      %v461 = vunpack.c.l.b16 %v217
      %v462 = vunpack.c.l.b16 %v218
      %v463 = vunpack.c.l.b16 %v219
      %v464 = vunpack.c.l.b16 %v220
      %v465 = vunpack.c.l.b16 %v221
      %v466 = vunpack.c.l.b16 %v222
      %v467 = vunpack.c.l.b16 %v223
      %v468 = vunpack.c.l.b16 %v224
      %v469 = vunpack.c.l.b16 %v225
      %v470 = vunpack.c.l.b16 %v226
      %v471 = vunpack.c.l.b16 %v227
      %v472 = vunpack.c.l.b16 %v228
      %v473 = vpack.c.b16 %v458, %v457
      %v474 = vpack.c.b16 %v460, %v459
      %v475 = vpack.c.b16 %v462, %v461
      %v476 = vpack.c.b16 %v464, %v463
      %v477 = vpack.c.b16 %v466, %v465
      %v478 = vpack.c.b16 %v468, %v467
      %v479 = vpack.c.b16 %v470, %v469
      %v480 = vpack.c.b16 %v472, %v471
      %v617 = vunpack.c.l.b16 %v229
      %v618 = vunpack.c.h.b16 %v229
      %v619 = vunpack.c.l.b16 %v230
      %v620 = vunpack.c.h.b16 %v230
      %v621 = vunpack.c.l.b16 %v231
      %v622 = vunpack.c.h.b16 %v231
      %v623 = vunpack.c.l.b16 %v232
      %v624 = vunpack.c.h.b16 %v232
      %v625 = vunpack.c.l.b16 %v233
      %v626 = vunpack.c.h.b16 %v233
      %v627 = vunpack.c.l.b16 %v234
      %v628 = vunpack.c.h.b16 %v234
      %v629 = vunpack.c.l.b16 %v235
      %v630 = vunpack.c.h.b16 %v235
      %v631 = vunpack.c.l.b16 %v236
      %v632 = vunpack.c.h.b16 %v236
      %v633 = vunpack.c.l.b16 %v237
      %v634 = vunpack.c.h.b16 %v237
      %v635 = vunpack.c.l.b16 %v238
      %v636 = vunpack.c.h.b16 %v238
      %v637 = vunpack.c.l.b16 %v239
      %v638 = vunpack.c.h.b16 %v239
      %v639 = vunpack.c.l.b16 %v240
      %v640 = vunpack.c.h.b16 %v240
      %v641 = vunpack.c.l.b16 %v241
      %v642 = vunpack.c.h.b16 %v241
      %v643 = vunpack.c.l.b16 %v242
      %v644 = vunpack.c.h.b16 %v242
      %v645 = vunpack.c.l.b16 %v243
      %v646 = vunpack.c.h.b16 %v243
      %v647 = vunpack.c.l.b16 %v244
      %v648 = vunpack.c.h.b16 %v244
      %v649 = vunpack.c.l.b16 %v245
      %v650 = vunpack.c.h.b16 %v245
      %v651 = vunpack.c.l.b16 %v246
      %v652 = vunpack.c.h.b16 %v246
      %v653 = vunpack.c.l.b16 %v247
      %v654 = vunpack.c.h.b16 %v247
      %v655 = vunpack.c.l.b16 %v248
      %v656 = vunpack.c.h.b16 %v248
      %v657 = vunpack.c.l.b16 %v249
      %v658 = vunpack.c.h.b16 %v249
      %v659 = vunpack.c.l.b16 %v250
      %v660 = vunpack.c.h.b16 %v250
      %v661 = vunpack.c.l.b16 %v251
      %v662 = vunpack.c.h.b16 %v251
      %v663 = vunpack.c.l.b16 %v252
      %v664 = vunpack.c.h.b16 %v252
      %v665 = vunpack.c.l.b16 %v253
      %v666 = vunpack.c.h.b16 %v253
      %v667 = vunpack.c.l.b16 %v254
      %v668 = vunpack.c.h.b16 %v254
      %v669 = vunpack.c.l.b16 %v255
      %v670 = vunpack.c.h.b16 %v255
      %v671 = vunpack.c.l.b16 %v256
      %v672 = vunpack.c.h.b16 %v256
      %v673 = vunpack.c.l.b16 %v257
      %v674 = vunpack.c.h.b16 %v257
      %v675 = vunpack.c.l.b16 %v258
      %v676 = vunpack.c.h.b16 %v258
      %v677 = vunpack.c.l.b16 %v259
      %v678 = vunpack.c.h.b16 %v259
      %v679 = vunpack.c.l.b16 %v260
      %v680 = vunpack.c.h.b16 %v260
      %v681 = vunpack.c.l.b16 %v261
      %v682 = vunpack.c.h.b16 %v261
      %v683 = vunpack.c.l.b16 %v262
      %v684 = vunpack.c.h.b16 %v262
      %v685 = vunpack.c.l.b16 %v263
      %v686 = vunpack.c.h.b16 %v263
      %v687 = vunpack.c.l.b16 %v264
      %v688 = vunpack.c.h.b16 %v264
      %v689 = vunpack.c.l.b16 %v265
      %v690 = vunpack.c.h.b16 %v265
      %v691 = vunpack.c.l.b16 %v266
      %v692 = vunpack.c.h.b16 %v266
      %v693 = vunpack.c.l.b16 %v267
      %v694 = vunpack.c.h.b16 %v267
      %v695 = vunpack.c.l.b16 %v268
      %v696 = vunpack.c.h.b16 %v268
      %v697 = vunpack.c.l.b16 %v269
      %v698 = vunpack.c.h.b16 %v269
      %v699 = vunpack.c.l.b16 %v270
      %v700 = vunpack.c.h.b16 %v270
      %v701 = vunpack.c.l.b16 %v271
      %v702 = vunpack.c.h.b16 %v271
      %v703 = vunpack.c.l.b16 %v272
      %v704 = vunpack.c.h.b16 %v272
      %v705 = vunpack.c.l.b16 %v273
      %v706 = vunpack.c.h.b16 %v273
      %v707 = vunpack.c.l.b16 %v274
      %v708 = vunpack.c.h.b16 %v274
      %v709 = vunpack.c.l.b16 %v275
      %v710 = vunpack.c.h.b16 %v275
      %v711 = vunpack.c.l.b16 %v276
      %v712 = vunpack.c.h.b16 %v276
      %v713 = vunpack.c.l.b16 %v277
      %v714 = vunpack.c.h.b16 %v277
      %v715 = vunpack.c.l.b16 %v278
      %v716 = vunpack.c.h.b16 %v278
      %v717 = vunpack.c.l.b16 %v279
      %v718 = vunpack.c.h.b16 %v279
      %v719 = vunpack.c.l.b16 %v280
      %v720 = vunpack.c.h.b16 %v280
      %v721 = vunpack.c.l.b16 %v281
      %v722 = vunpack.c.h.b16 %v281
      %v723 = vunpack.c.l.b16 %v282
      %v724 = vunpack.c.h.b16 %v282
      %v725 = vunpack.c.l.b16 %v283
      %v726 = vunpack.c.h.b16 %v283
      %v727 = vunpack.c.l.b16 %v284
      %v728 = vunpack.c.h.b16 %v284
      %v729 = vunpack.c.l.b16 %v285
      %v730 = vunpack.c.h.b16 %v285
      %v731 = vunpack.c.l.b16 %v286
      %v732 = vunpack.c.h.b16 %v286
      %v733 = vunpack.c.l.b16 %v287
      %v734 = vunpack.c.h.b16 %v287
      %v735 = vunpack.c.l.b16 %v288
      %v736 = vunpack.c.h.b16 %v288
      %v737 = vunpack.c.l.b16 %v289
      %v738 = vunpack.c.h.b16 %v289
      %v739 = vunpack.c.l.b16 %v290
      %v740 = vunpack.c.h.b16 %v290
      %v741 = vunpack.c.l.b16 %v291
      %v742 = vunpack.c.h.b16 %v291
      %v743 = vunpack.c.l.b16 %v292
      %v744 = vunpack.c.h.b16 %v292
      %v745 = vunpack.c.l.b16 %v293
      %v746 = vunpack.c.h.b16 %v293
      %v747 = vunpack.c.l.b16 %v294
      %v748 = vunpack.c.h.b16 %v294
      %v749 = vunpack.c.l.b16 %v295
      %v750 = vunpack.c.h.b16 %v295
      %v751 = vunpack.c.l.b16 %v296
      %v752 = vunpack.c.h.b16 %v296
      %v753 = vunpack.c.l.b16 %v297
      %v754 = vunpack.c.h.b16 %v297
      %v755 = vunpack.c.l.b16 %v298
      %v756 = vunpack.c.h.b16 %v298
      %v757 = vunpack.c.l.b16 %v299
      %v758 = vunpack.c.h.b16 %v299
      %v759 = vunpack.c.l.b16 %v300
      %v760 = vunpack.c.h.b16 %v300
      %v761 = vunpack.c.l.b16 %v301
      %v762 = vunpack.c.h.b16 %v301
      %v763 = vunpack.c.l.b16 %v302
      %v764 = vunpack.c.h.b16 %v302
      %v765 = vunpack.c.l.b16 %v303
      %v766 = vunpack.c.h.b16 %v303
      %v767 = vunpack.c.l.b16 %v304
      %v768 = vunpack.c.h.b16 %v304
      %v769 = vunpack.c.l.b16 %v305
      %v770 = vunpack.c.h.b16 %v305
      %v771 = vunpack.c.l.b16 %v306
      %v772 = vunpack.c.h.b16 %v306
      %v773 = vunpack.c.l.b16 %v307
      %v774 = vunpack.c.h.b16 %v307
      %v775 = vunpack.c.l.b16 %v308
      %v776 = vunpack.c.h.b16 %v308
      %v777 = vunpack.c.l.b16 %v309
      %v778 = vunpack.c.h.b16 %v309
      %v779 = vunpack.c.l.b16 %v310
      %v780 = vunpack.c.h.b16 %v310
      %v781 = vunpack.c.l.b16 %v311
      %v782 = vunpack.c.h.b16 %v311
      %v783 = vunpack.c.l.b16 %v312
      %v784 = vunpack.c.h.b16 %v312
      %v785 = vunpack.c.l.b16 %v313
      %v786 = vunpack.c.h.b16 %v313
      %v787 = vunpack.c.l.b16 %v314
      %v788 = vunpack.c.h.b16 %v314
      %v789 = vunpack.c.l.b16 %v315
      %v790 = vunpack.c.h.b16 %v315
      %v791 = vunpack.c.l.b16 %v316
      %v792 = vunpack.c.h.b16 %v316
      %v793 = vunpack.c.l.b16 %v317
      %v794 = vunpack.c.h.b16 %v317
      %v795 = vunpack.c.l.b16 %v318
      %v796 = vunpack.c.h.b16 %v318
      %v797 = vunpack.c.l.b16 %v319
      %v798 = vunpack.c.h.b16 %v319
      %v799 = vunpack.c.l.b16 %v320
      %v800 = vunpack.c.h.b16 %v320
      %v801 = vunpack.c.l.b16 %v321
      %v802 = vunpack.c.h.b16 %v321
      %v803 = vunpack.c.l.b16 %v322
      %v804 = vunpack.c.h.b16 %v322
      %v805 = vunpack.c.l.b16 %v323
      %v806 = vunpack.c.h.b16 %v323
      %v807 = vunpack.c.l.b16 %v324
      %v808 = vunpack.c.h.b16 %v324
      %v809 = vunpack.c.l.b16 %v325
      %v810 = vunpack.c.h.b16 %v325
      %v811 = vunpack.c.l.b16 %v326
      %v812 = vunpack.c.h.b16 %v326
      %v813 = vunpack.c.l.b16 %v327
      %v814 = vunpack.c.h.b16 %v327
      %v815 = vunpack.c.l.b16 %v328
      %v816 = vunpack.c.h.b16 %v328
      %v817 = vunpack.c.l.b16 %v329
      %v818 = vunpack.c.h.b16 %v329
      %v819 = vunpack.c.l.b16 %v330
      %v820 = vunpack.c.h.b16 %v330
      %v821 = vunpack.c.l.b16 %v331
      %v822 = vunpack.c.h.b16 %v331
      %v823 = vunpack.c.l.b16 %v332
      %v824 = vunpack.c.h.b16 %v332
      %v825 = vunpack.c.l.b16 %v333
      %v826 = vunpack.c.h.b16 %v333
      %v827 = vunpack.c.l.b16 %v334
      %v828 = vunpack.c.h.b16 %v334
      %v829 = vunpack.c.l.b16 %v335
      %v830 = vunpack.c.h.b16 %v335
      %v831 = vunpack.c.l.b16 %v336
      %v832 = vunpack.c.h.b16 %v336
      %v833 = vunpack.c.l.b16 %v337
      %v834 = vunpack.c.h.b16 %v337
      %v835 = vunpack.c.l.b16 %v338
      %v836 = vunpack.c.h.b16 %v338
      %v837 = vunpack.c.l.b16 %v339
      %v838 = vunpack.c.h.b16 %v339
      %v839 = vunpack.c.l.b16 %v340
      %v840 = vunpack.c.h.b16 %v340
      %v841 = vunpack.c.l.b16 %v341
      %v842 = vunpack.c.h.b16 %v341
      %v843 = vunpack.c.l.b16 %v342
      %v844 = vunpack.c.h.b16 %v342
      %v845 = vunpack.c.l.b16 %v343
      %v846 = vunpack.c.h.b16 %v343
      %v847 = vunpack.c.l.b16 %v344
      %v848 = vunpack.c.h.b16 %v344
      %v849 = vunpack.c.l.b16 %v345
      %v850 = vunpack.c.h.b16 %v345
      %v851 = vunpack.c.l.b16 %v346
      %v852 = vunpack.c.h.b16 %v346
      %v853 = vunpack.c.l.b16 %v347
      %v854 = vunpack.c.h.b16 %v347
      %v855 = vunpack.c.l.b16 %v348
      %v856 = vunpack.c.h.b16 %v348
      %v857 = vunpack.c.l.b16 %v349
      %v858 = vunpack.c.h.b16 %v349
      %v859 = vunpack.c.l.b16 %v350
      %v860 = vunpack.c.h.b16 %v350
      %v861 = vunpack.c.l.b16 %v351
      %v862 = vunpack.c.h.b16 %v351
      %v863 = vunpack.c.l.b16 %v352
      %v864 = vunpack.c.h.b16 %v352
      %v865 = vunpack.c.l.b16 %v353
      %v866 = vunpack.c.h.b16 %v353
      %v867 = vunpack.c.l.b16 %v354
      %v868 = vunpack.c.h.b16 %v354
      %v869 = vunpack.c.l.b16 %v355
      %v870 = vunpack.c.h.b16 %v355
      %v871 = vunpack.c.l.b16 %v356
      %v872 = vunpack.c.h.b16 %v356
      %v873 = vpack.c.b16 %v633, %v617
      %v874 = vpack.c.b16 %v634, %v618
      %v875 = vpack.c.b16 %v635, %v619
      %v876 = vpack.c.b16 %v636, %v620
      %v877 = vpack.c.b16 %v637, %v621
      %v878 = vpack.c.b16 %v638, %v622
      %v879 = vpack.c.b16 %v639, %v623
      %v880 = vpack.c.b16 %v640, %v624
      %v881 = vpack.c.b16 %v641, %v625
      %v882 = vpack.c.b16 %v642, %v626
      %v883 = vpack.c.b16 %v643, %v627
      %v884 = vpack.c.b16 %v644, %v628
      %v885 = vpack.c.b16 %v645, %v629
      %v886 = vpack.c.b16 %v646, %v630
      %v887 = vpack.c.b16 %v647, %v631
      %v888 = vpack.c.b16 %v648, %v632
      %v889 = vpack.c.b16 %v665, %v649
      %v890 = vpack.c.b16 %v666, %v650
      %v891 = vpack.c.b16 %v667, %v651
      %v892 = vpack.c.b16 %v668, %v652
      %v893 = vpack.c.b16 %v669, %v653
      %v894 = vpack.c.b16 %v670, %v654
      %v895 = vpack.c.b16 %v671, %v655
      %v896 = vpack.c.b16 %v672, %v656
      %v897 = vpack.c.b16 %v673, %v657
      %v898 = vpack.c.b16 %v674, %v658
      %v899 = vpack.c.b16 %v675, %v659
      %v900 = vpack.c.b16 %v676, %v660
      %v901 = vpack.c.b16 %v677, %v661
      %v902 = vpack.c.b16 %v678, %v662
      %v903 = vpack.c.b16 %v679, %v663
      %v904 = vpack.c.b16 %v680, %v664
      %v905 = vpack.c.b16 %v697, %v681
      %v906 = vpack.c.b16 %v698, %v682
      %v907 = vpack.c.b16 %v699, %v683
      %v908 = vpack.c.b16 %v700, %v684
      %v909 = vpack.c.b16 %v701, %v685
      %v910 = vpack.c.b16 %v702, %v686
      %v911 = vpack.c.b16 %v703, %v687
      %v912 = vpack.c.b16 %v704, %v688
      %v913 = vpack.c.b16 %v705, %v689
      %v914 = vpack.c.b16 %v706, %v690
      %v915 = vpack.c.b16 %v707, %v691
      %v916 = vpack.c.b16 %v708, %v692
      %v917 = vpack.c.b16 %v709, %v693
      %v918 = vpack.c.b16 %v710, %v694
      %v919 = vpack.c.b16 %v711, %v695
      %v920 = vpack.c.b16 %v712, %v696
      %v921 = vpack.c.b16 %v729, %v713
      %v922 = vpack.c.b16 %v730, %v714
      %v923 = vpack.c.b16 %v731, %v715
      %v924 = vpack.c.b16 %v732, %v716
      %v925 = vpack.c.b16 %v733, %v717
      %v926 = vpack.c.b16 %v734, %v718
      %v927 = vpack.c.b16 %v735, %v719
      %v928 = vpack.c.b16 %v736, %v720
      %v929 = vpack.c.b16 %v737, %v721
      %v930 = vpack.c.b16 %v738, %v722
      %v931 = vpack.c.b16 %v739, %v723
      %v932 = vpack.c.b16 %v740, %v724
      %v933 = vpack.c.b16 %v741, %v725
      %v934 = vpack.c.b16 %v742, %v726
      %v935 = vpack.c.b16 %v743, %v727
      %v936 = vpack.c.b16 %v744, %v728
      %v937 = vpack.c.b16 %v761, %v745
      %v938 = vpack.c.b16 %v762, %v746
      %v939 = vpack.c.b16 %v763, %v747
      %v940 = vpack.c.b16 %v764, %v748
      %v941 = vpack.c.b16 %v765, %v749
      %v942 = vpack.c.b16 %v766, %v750
      %v943 = vpack.c.b16 %v767, %v751
      %v944 = vpack.c.b16 %v768, %v752
      %v945 = vpack.c.b16 %v769, %v753
      %v946 = vpack.c.b16 %v770, %v754
      %v947 = vpack.c.b16 %v771, %v755
      %v948 = vpack.c.b16 %v772, %v756
      %v949 = vpack.c.b16 %v773, %v757
      %v950 = vpack.c.b16 %v774, %v758
      %v951 = vpack.c.b16 %v775, %v759
      %v952 = vpack.c.b16 %v776, %v760
      %v953 = vpack.c.b16 %v793, %v777
      %v954 = vpack.c.b16 %v794, %v778
      %v955 = vpack.c.b16 %v795, %v779
      %v956 = vpack.c.b16 %v796, %v780
      %v957 = vpack.c.b16 %v797, %v781
      %v958 = vpack.c.b16 %v798, %v782
      %v959 = vpack.c.b16 %v799, %v783
      %v960 = vpack.c.b16 %v800, %v784
      %v961 = vpack.c.b16 %v801, %v785
      %v962 = vpack.c.b16 %v802, %v786
      %v963 = vpack.c.b16 %v803, %v787
      %v964 = vpack.c.b16 %v804, %v788
      %v965 = vpack.c.b16 %v805, %v789
      %v966 = vpack.c.b16 %v806, %v790
      %v967 = vpack.c.b16 %v807, %v791
      %v968 = vpack.c.b16 %v808, %v792
      %v969 = vpack.c.b16 %v825, %v809
      %v970 = vpack.c.b16 %v826, %v810
      %v971 = vpack.c.b16 %v827, %v811
      %v972 = vpack.c.b16 %v828, %v812
      %v973 = vpack.c.b16 %v829, %v813
      %v974 = vpack.c.b16 %v830, %v814
      %v975 = vpack.c.b16 %v831, %v815
      %v976 = vpack.c.b16 %v832, %v816
      %v977 = vpack.c.b16 %v833, %v817
      %v978 = vpack.c.b16 %v834, %v818
      %v979 = vpack.c.b16 %v835, %v819
      %v980 = vpack.c.b16 %v836, %v820
      %v981 = vpack.c.b16 %v837, %v821
      %v982 = vpack.c.b16 %v838, %v822
      %v983 = vpack.c.b16 %v839, %v823
      %v984 = vpack.c.b16 %v840, %v824
      %v985 = vpack.c.b16 %v857, %v841
      %v986 = vpack.c.b16 %v858, %v842
      %v987 = vpack.c.b16 %v859, %v843
      %v988 = vpack.c.b16 %v860, %v844
      %v989 = vpack.c.b16 %v861, %v845
      %v990 = vpack.c.b16 %v862, %v846
      %v991 = vpack.c.b16 %v863, %v847
      %v992 = vpack.c.b16 %v864, %v848
      %v993 = vpack.c.b16 %v865, %v849
      %v994 = vpack.c.b16 %v866, %v850
      %v995 = vpack.c.b16 %v867, %v851
      %v996 = vpack.c.b16 %v868, %v852
      %v997 = vpack.c.b16 %v869, %v853
      %v998 = vpack.c.b16 %v870, %v854
      %v999 = vpack.c.b16 %v871, %v855
      %v1000 = vpack.c.b16 %v872, %v856
      %1129 = vmatprep.subr.bf16.mxu0 %v874
      %1130 = vmatpush1.bf16.msra.mxu0 %v873
      %1131 = vmatprep.subr.bf16.mxu0 %v890
      %1132 = vmatpush1.bf16.msra.mxu0 %v889
      %1133 = vmatprep.subr.bf16.mxu0 %v906
      %1134 = vmatpush1.bf16.msra.mxu0 %v905
      %1135 = vmatprep.subr.bf16.mxu0 %v922
      %1136 = vmatpush1.bf16.msra.mxu0 %v921
      %1137 = vmatprep.subr.bf16.mxu0 %v938
      %1138 = vmatpush1.bf16.msra.mxu0 %v937
      %1139 = vmatprep.subr.bf16.mxu0 %v954
      %1140 = vmatpush1.bf16.msra.mxu0 %v953
      %1141 = vmatprep.subr.bf16.mxu0 %v970
      %1142 = vmatpush1.bf16.msra.mxu0 %v969
      %1143 = vmatprep.subr.bf16.mxu0 %v986
      %1144 = vmatpush1.bf16.msra.mxu0 %v985
      %1145 = vmatprep.subr.bf16.mxu0 0
      %1146 = vmatpush1.bf16.msra.mxu0 0
      %1147 = vmatprep.subr.bf16.mxu0 0
      %1148 = vmatpush1.bf16.msra.mxu0 0
      %1149 = vmatprep.subr.bf16.mxu0 0
      %1150 = vmatpush1.bf16.msra.mxu0 0
      %1151 = vmatprep.subr.bf16.mxu0 0
      %1152 = vmatpush1.bf16.msra.mxu0 0
      %1153 = vmatprep.subr.bf16.mxu0 0
      %1154 = vmatpush1.bf16.msra.mxu0 0
      %1155 = vmatprep.subr.bf16.mxu0 0
      %1156 = vmatpush1.bf16.msra.mxu0 0
      %1157 = vmatprep.subr.bf16.mxu0 0
      %1158 = vmatpush1.bf16.msra.mxu0 0
      %1159 = vmatprep.subr.bf16.mxu0 0
      %1160 = vmatpush1.bf16.msra.mxu0 0
      %1161 = vmatprep.mubr.bf16.mxu0 0
      %1162 = vmatmul.mubr.bf16.gmra.mrb[0].mxu0 %v473
      %v1163 = vpop.f32.mrb[0].mxu0
      %v1164 = vadd.f32 %v364, %v1163
      %v1165 = vpop.f32.mrb[0].mxu0
      %v1166 = vadd.f32 %v368, %v1165
      %v1167 = vpop.f32.mrb[0].mxu0
      %v1168 = vadd.f32 %v364, %v1167
      %v1169 = vpop.f32.mrb[0].mxu0
      %v1170 = vadd.f32 %v368, %v1169
      %1171 = vmatprep.mubr.bf16.mxu0 0
      %1172 = vmatmul.mubr.bf16.gmra.mrb[0].mxu0 %v474
      %v1173 = vpop.f32.mrb[0].mxu0
      %v1174 = vadd.f32 %v364, %v1173
      %v1175 = vpop.f32.mrb[0].mxu0
      %v1176 = vadd.f32 %v368, %v1175
      %v1177 = vpop.f32.mrb[0].mxu0
      %v1178 = vadd.f32 %v364, %v1177
      %v1179 = vpop.f32.mrb[0].mxu0
      %v1180 = vadd.f32 %v368, %v1179
      %1181 = vmatprep.mubr.bf16.mxu0 0
      %1182 = vmatmul.mubr.bf16.gmra.mrb[0].mxu0 %v475
      %v1183 = vpop.f32.mrb[0].mxu0
      %v1184 = vadd.f32 %v364, %v1183
      %v1185 = vpop.f32.mrb[0].mxu0
      %v1186 = vadd.f32 %v368, %v1185
      %v1187 = vpop.f32.mrb[0].mxu0
      %v1188 = vadd.f32 %v364, %v1187
      %v1189 = vpop.f32.mrb[0].mxu0
      %v1190 = vadd.f32 %v368, %v1189
      %1191 = vmatprep.mubr.bf16.mxu0 0
      %1192 = vmatmul.mubr.bf16.gmra.mrb[0].mxu0 %v476
      %v1193 = vpop.f32.mrb[0].mxu0
      %v1194 = vadd.f32 %v364, %v1193
      %v1195 = vpop.f32.mrb[0].mxu0
      %v1196 = vadd.f32 %v368, %v1195
      %v1197 = vpop.f32.mrb[0].mxu0
      %v1198 = vadd.f32 %v364, %v1197
      %v1199 = vpop.f32.mrb[0].mxu0
      %v1200 = vadd.f32 %v368, %v1199
      %1201 = vmatprep.mubr.bf16.mxu0 0
      %1202 = vmatmul.mubr.bf16.gmra.mrb[0].mxu0 %v477
      %v1203 = vpop.f32.mrb[0].mxu0
      %v1204 = vadd.f32 %v364, %v1203
      %v1205 = vpop.f32.mrb[0].mxu0
      %v1206 = vadd.f32 %v368, %v1205
      %v1207 = vpop.f32.mrb[0].mxu0
      %v1208 = vadd.f32 %v364, %v1207
      %v1209 = vpop.f32.mrb[0].mxu0
      %v1210 = vadd.f32 %v368, %v1209
      %1211 = vmatprep.mubr.bf16.mxu0 0
      %1212 = vmatmul.mubr.bf16.gmra.mrb[0].mxu0 %v478
      %v1213 = vpop.f32.mrb[0].mxu0
      %v1214 = vadd.f32 %v364, %v1213
      %v1215 = vpop.f32.mrb[0].mxu0
      %v1216 = vadd.f32 %v368, %v1215
      %v1217 = vpop.f32.mrb[0].mxu0
      %v1218 = vadd.f32 %v364, %v1217
      %v1219 = vpop.f32.mrb[0].mxu0
      %v1220 = vadd.f32 %v368, %v1219
      %1221 = vmatprep.mubr.bf16.mxu0 0
      %1222 = vmatmul.mubr.bf16.gmra.mrb[0].mxu0 %v479
      %v1223 = vpop.f32.mrb[0].mxu0
      %v1224 = vadd.f32 %v364, %v1223
      %v1225 = vpop.f32.mrb[0].mxu0
      %v1226 = vadd.f32 %v368, %v1225
      %v1227 = vpop.f32.mrb[0].mxu0
      %v1228 = vadd.f32 %v364, %v1227
      %v1229 = vpop.f32.mrb[0].mxu0
      %v1230 = vadd.f32 %v368, %v1229
      %1231 = vmatprep.mubr.bf16.mxu0 0
      %1232 = vmatmul.mubr.bf16.gmra.mrb[0].mxu0 %v480
      %v1233 = vpop.f32.mrb[0].mxu0
      %v1234 = vadd.f32 %v364, %v1233
      %v1235 = vpop.f32.mrb[0].mxu0
      %v1236 = vadd.f32 %v368, %v1235
      %v1237 = vpop.f32.mrb[0].mxu0
      %v1238 = vadd.f32 %v364, %v1237
      %v1239 = vpop.f32.mrb[0].mxu0
      %v1240 = vadd.f32 %v368, %v1239
      %1241 = vdwg.mxu0
      %1242 = vmatprep.subr.bf16.mxu0 %v876
      %1243 = vmatpush1.bf16.msra.mxu0 %v875
      %1244 = vmatprep.subr.bf16.mxu0 %v892
      %1245 = vmatpush1.bf16.msra.mxu0 %v891
      %1246 = vmatprep.subr.bf16.mxu0 %v908
      %1247 = vmatpush1.bf16.msra.mxu0 %v907
      %1248 = vmatprep.subr.bf16.mxu0 %v924
      %1249 = vmatpush1.bf16.msra.mxu0 %v923
      %1250 = vmatprep.subr.bf16.mxu0 %v940
      %1251 = vmatpush1.bf16.msra.mxu0 %v939
      %1252 = vmatprep.subr.bf16.mxu0 %v956
      %1253 = vmatpush1.bf16.msra.mxu0 %v955
      %1254 = vmatprep.subr.bf16.mxu0 %v972
      %1255 = vmatpush1.bf16.msra.mxu0 %v971
      %1256 = vmatprep.subr.bf16.mxu0 %v988
      %1257 = vmatpush1.bf16.msra.mxu0 %v987
      %1258 = vmatprep.subr.bf16.mxu0 0
      %1259 = vmatpush1.bf16.msra.mxu0 0
      %1260 = vmatprep.subr.bf16.mxu0 0
      %1261 = vmatpush1.bf16.msra.mxu0 0
      %1262 = vmatprep.subr.bf16.mxu0 0
      %1263 = vmatpush1.bf16.msra.mxu0 0
      %1264 = vmatprep.subr.bf16.mxu0 0
      %1265 = vmatpush1.bf16.msra.mxu0 0
      %1266 = vmatprep.subr.bf16.mxu0 0
      %1267 = vmatpush1.bf16.msra.mxu0 0
      %1268 = vmatprep.subr.bf16.mxu0 0
      %1269 = vmatpush1.bf16.msra.mxu0 0
      %1270 = vmatprep.subr.bf16.mxu0 0
      %1271 = vmatpush1.bf16.msra.mxu0 0
      %1272 = vmatprep.subr.bf16.mxu0 0
      %1273 = vmatpush1.bf16.msra.mxu0 0
      %1274 = vmatprep.mubr.bf16.mxu0 0
      %1275 = vmatmul.mubr.bf16.gmra.mrb[0].mxu0 %v473
      %v1276 = vpop.f32.mrb[0].mxu0
      %v1277 = vadd.f32 %v372, %v1276
      %v1278 = vpop.f32.mrb[0].mxu0
      %v1279 = vadd.f32 %v376, %v1278
      %v1280 = vpop.f32.mrb[0].mxu0
      %v1281 = vadd.f32 %v372, %v1280
      %v1282 = vpop.f32.mrb[0].mxu0
      %v1283 = vadd.f32 %v376, %v1282
      %1284 = vmatprep.mubr.bf16.mxu0 0
      %1285 = vmatmul.mubr.bf16.gmra.mrb[0].mxu0 %v474
      %v1286 = vpop.f32.mrb[0].mxu0
      %v1287 = vadd.f32 %v372, %v1286
      %v1288 = vpop.f32.mrb[0].mxu0
      %v1289 = vadd.f32 %v376, %v1288
      %v1290 = vpop.f32.mrb[0].mxu0
      %v1291 = vadd.f32 %v372, %v1290
      %v1292 = vpop.f32.mrb[0].mxu0
      %v1293 = vadd.f32 %v376, %v1292
      %1294 = vmatprep.mubr.bf16.mxu0 0
      %1295 = vmatmul.mubr.bf16.gmra.mrb[0].mxu0 %v475
      %v1296 = vpop.f32.mrb[0].mxu0
      %v1297 = vadd.f32 %v372, %v1296
      %v1298 = vpop.f32.mrb[0].mxu0
      %v1299 = vadd.f32 %v376, %v1298
      %v1300 = vpop.f32.mrb[0].mxu0
      %v1301 = vadd.f32 %v372, %v1300
      %v1302 = vpop.f32.mrb[0].mxu0
      %v1303 = vadd.f32 %v376, %v1302
      %1304 = vmatprep.mubr.bf16.mxu0 0
      %1305 = vmatmul.mubr.bf16.gmra.mrb[0].mxu0 %v476
      %v1306 = vpop.f32.mrb[0].mxu0
      %v1307 = vadd.f32 %v372, %v1306
      %v1308 = vpop.f32.mrb[0].mxu0
      %v1309 = vadd.f32 %v376, %v1308
      %v1310 = vpop.f32.mrb[0].mxu0
      %v1311 = vadd.f32 %v372, %v1310
      %v1312 = vpop.f32.mrb[0].mxu0
      %v1313 = vadd.f32 %v376, %v1312
      %1314 = vmatprep.mubr.bf16.mxu0 0
      %1315 = vmatmul.mubr.bf16.gmra.mrb[0].mxu0 %v477
      %v1316 = vpop.f32.mrb[0].mxu0
      %v1317 = vadd.f32 %v372, %v1316
      %v1318 = vpop.f32.mrb[0].mxu0
      %v1319 = vadd.f32 %v376, %v1318
      %v1320 = vpop.f32.mrb[0].mxu0
      %v1321 = vadd.f32 %v372, %v1320
      %v1322 = vpop.f32.mrb[0].mxu0
      %v1323 = vadd.f32 %v376, %v1322
      %1324 = vmatprep.mubr.bf16.mxu0 0
      %1325 = vmatmul.mubr.bf16.gmra.mrb[0].mxu0 %v478
      %v1326 = vpop.f32.mrb[0].mxu0
      %v1327 = vadd.f32 %v372, %v1326
      %v1328 = vpop.f32.mrb[0].mxu0
      %v1329 = vadd.f32 %v376, %v1328
      %v1330 = vpop.f32.mrb[0].mxu0
      %v1331 = vadd.f32 %v372, %v1330
      %v1332 = vpop.f32.mrb[0].mxu0
      %v1333 = vadd.f32 %v376, %v1332
      %1334 = vmatprep.mubr.bf16.mxu0 0
      %1335 = vmatmul.mubr.bf16.gmra.mrb[0].mxu0 %v479
      %v1336 = vpop.f32.mrb[0].mxu0
      %v1337 = vadd.f32 %v372, %v1336
      %v1338 = vpop.f32.mrb[0].mxu0
      %v1339 = vadd.f32 %v376, %v1338
      %v1340 = vpop.f32.mrb[0].mxu0
      %v1341 = vadd.f32 %v372, %v1340
      %v1342 = vpop.f32.mrb[0].mxu0
      %v1343 = vadd.f32 %v376, %v1342
      %1344 = vmatprep.mubr.bf16.mxu0 0
      %1345 = vmatmul.mubr.bf16.gmra.mrb[0].mxu0 %v480
      %v1346 = vpop.f32.mrb[0].mxu0
      %v1347 = vadd.f32 %v372, %v1346
      %v1348 = vpop.f32.mrb[0].mxu0
      %v1349 = vadd.f32 %v376, %v1348
      %v1350 = vpop.f32.mrb[0].mxu0
      %v1351 = vadd.f32 %v372, %v1350
      %v1352 = vpop.f32.mrb[0].mxu0
      %v1353 = vadd.f32 %v376, %v1352
      %1354 = vdwg.mxu0
      %1355 = vmatprep.subr.bf16.mxu0 %v878
      %1356 = vmatpush1.bf16.msra.mxu0 %v877
      %1357 = vmatprep.subr.bf16.mxu0 %v894
      %1358 = vmatpush1.bf16.msra.mxu0 %v893
      %1359 = vmatprep.subr.bf16.mxu0 %v910
      %1360 = vmatpush1.bf16.msra.mxu0 %v909
      %1361 = vmatprep.subr.bf16.mxu0 %v926
      %1362 = vmatpush1.bf16.msra.mxu0 %v925
      %1363 = vmatprep.subr.bf16.mxu0 %v942
      %1364 = vmatpush1.bf16.msra.mxu0 %v941
      %1365 = vmatprep.subr.bf16.mxu0 %v958
      %1366 = vmatpush1.bf16.msra.mxu0 %v957
      %1367 = vmatprep.subr.bf16.mxu0 %v974
      %1368 = vmatpush1.bf16.msra.mxu0 %v973
      %1369 = vmatprep.subr.bf16.mxu0 %v990
      %1370 = vmatpush1.bf16.msra.mxu0 %v989
      %1371 = vmatprep.subr.bf16.mxu0 0
      %1372 = vmatpush1.bf16.msra.mxu0 0
      %1373 = vmatprep.subr.bf16.mxu0 0
      %1374 = vmatpush1.bf16.msra.mxu0 0
      %1375 = vmatprep.subr.bf16.mxu0 0
      %1376 = vmatpush1.bf16.msra.mxu0 0
      %1377 = vmatprep.subr.bf16.mxu0 0
      %1378 = vmatpush1.bf16.msra.mxu0 0
      %1379 = vmatprep.subr.bf16.mxu0 0
      %1380 = vmatpush1.bf16.msra.mxu0 0
      %1381 = vmatprep.subr.bf16.mxu0 0
      %1382 = vmatpush1.bf16.msra.mxu0 0
      %1383 = vmatprep.subr.bf16.mxu0 0
      %1384 = vmatpush1.bf16.msra.mxu0 0
      %1385 = vmatprep.subr.bf16.mxu0 0
      %1386 = vmatpush1.bf16.msra.mxu0 0
      %1387 = vmatprep.mubr.bf16.mxu0 0
      %1388 = vmatmul.mubr.bf16.gmra.mrb[0].mxu0 %v473
      %v1389 = vpop.f32.mrb[0].mxu0
      %v1390 = vadd.f32 %v380, %v1389
      %v1391 = vpop.f32.mrb[0].mxu0
      %v1392 = vadd.f32 %v384, %v1391
      %v1393 = vpop.f32.mrb[0].mxu0
      %v1394 = vadd.f32 %v380, %v1393
      %v1395 = vpop.f32.mrb[0].mxu0
      %v1396 = vadd.f32 %v384, %v1395
      %1397 = vmatprep.mubr.bf16.mxu0 0
      %1398 = vmatmul.mubr.bf16.gmra.mrb[0].mxu0 %v474
      %v1399 = vpop.f32.mrb[0].mxu0
      %v1400 = vadd.f32 %v380, %v1399
      %v1401 = vpop.f32.mrb[0].mxu0
      %v1402 = vadd.f32 %v384, %v1401
      %v1403 = vpop.f32.mrb[0].mxu0
      %v1404 = vadd.f32 %v380, %v1403
      %v1405 = vpop.f32.mrb[0].mxu0
      %v1406 = vadd.f32 %v384, %v1405
      %1407 = vmatprep.mubr.bf16.mxu0 0
      %1408 = vmatmul.mubr.bf16.gmra.mrb[0].mxu0 %v475
      %v1409 = vpop.f32.mrb[0].mxu0
      %v1410 = vadd.f32 %v380, %v1409
      %v1411 = vpop.f32.mrb[0].mxu0
      %v1412 = vadd.f32 %v384, %v1411
      %v1413 = vpop.f32.mrb[0].mxu0
      %v1414 = vadd.f32 %v380, %v1413
      %v1415 = vpop.f32.mrb[0].mxu0
      %v1416 = vadd.f32 %v384, %v1415
      %1417 = vmatprep.mubr.bf16.mxu0 0
      %1418 = vmatmul.mubr.bf16.gmra.mrb[0].mxu0 %v476
      %v1419 = vpop.f32.mrb[0].mxu0
      %v1420 = vadd.f32 %v380, %v1419
      %v1421 = vpop.f32.mrb[0].mxu0
      %v1422 = vadd.f32 %v384, %v1421
      %v1423 = vpop.f32.mrb[0].mxu0
      %v1424 = vadd.f32 %v380, %v1423
      %v1425 = vpop.f32.mrb[0].mxu0
      %v1426 = vadd.f32 %v384, %v1425
      %1427 = vmatprep.mubr.bf16.mxu0 0
      %1428 = vmatmul.mubr.bf16.gmra.mrb[0].mxu0 %v477
      %v1429 = vpop.f32.mrb[0].mxu0
      %v1430 = vadd.f32 %v380, %v1429
      %v1431 = vpop.f32.mrb[0].mxu0
      %v1432 = vadd.f32 %v384, %v1431
      %v1433 = vpop.f32.mrb[0].mxu0
      %v1434 = vadd.f32 %v380, %v1433
      %v1435 = vpop.f32.mrb[0].mxu0
      %v1436 = vadd.f32 %v384, %v1435
      %1437 = vmatprep.mubr.bf16.mxu0 0
      %1438 = vmatmul.mubr.bf16.gmra.mrb[0].mxu0 %v478
      %v1439 = vpop.f32.mrb[0].mxu0
      %v1440 = vadd.f32 %v380, %v1439
      %v1441 = vpop.f32.mrb[0].mxu0
      %v1442 = vadd.f32 %v384, %v1441
      %v1443 = vpop.f32.mrb[0].mxu0
      %v1444 = vadd.f32 %v380, %v1443
      %v1445 = vpop.f32.mrb[0].mxu0
      %v1446 = vadd.f32 %v384, %v1445
      %1447 = vmatprep.mubr.bf16.mxu0 0
      %1448 = vmatmul.mubr.bf16.gmra.mrb[0].mxu0 %v479
      %v1449 = vpop.f32.mrb[0].mxu0
      %v1450 = vadd.f32 %v380, %v1449
      %v1451 = vpop.f32.mrb[0].mxu0
      %v1452 = vadd.f32 %v384, %v1451
      %v1453 = vpop.f32.mrb[0].mxu0
      %v1454 = vadd.f32 %v380, %v1453
      %v1455 = vpop.f32.mrb[0].mxu0
      %v1456 = vadd.f32 %v384, %v1455
      %1457 = vmatprep.mubr.bf16.mxu0 0
      %1458 = vmatmul.mubr.bf16.gmra.mrb[0].mxu0 %v480
      %v1459 = vpop.f32.mrb[0].mxu0
      %v1460 = vadd.f32 %v380, %v1459
      %v1461 = vpop.f32.mrb[0].mxu0
      %v1462 = vadd.f32 %v384, %v1461
      %v1463 = vpop.f32.mrb[0].mxu0
      %v1464 = vadd.f32 %v380, %v1463
      %v1465 = vpop.f32.mrb[0].mxu0
      %v1466 = vadd.f32 %v384, %v1465
      %1467 = vdwg.mxu0
      %1468 = vmatprep.subr.bf16.mxu0 %v880
      %1469 = vmatpush1.bf16.msra.mxu0 %v879
      %1470 = vmatprep.subr.bf16.mxu0 %v896
      %1471 = vmatpush1.bf16.msra.mxu0 %v895
      %1472 = vmatprep.subr.bf16.mxu0 %v912
      %1473 = vmatpush1.bf16.msra.mxu0 %v911
      %1474 = vmatprep.subr.bf16.mxu0 %v928
      %1475 = vmatpush1.bf16.msra.mxu0 %v927
      %1476 = vmatprep.subr.bf16.mxu0 %v944
      %1477 = vmatpush1.bf16.msra.mxu0 %v943
      %1478 = vmatprep.subr.bf16.mxu0 %v960
      %1479 = vmatpush1.bf16.msra.mxu0 %v959
      %1480 = vmatprep.subr.bf16.mxu0 %v976
      %1481 = vmatpush1.bf16.msra.mxu0 %v975
      %1482 = vmatprep.subr.bf16.mxu0 %v992
      %1483 = vmatpush1.bf16.msra.mxu0 %v991
      %1484 = vmatprep.subr.bf16.mxu0 0
      %1485 = vmatpush1.bf16.msra.mxu0 0
      %1486 = vmatprep.subr.bf16.mxu0 0
      %1487 = vmatpush1.bf16.msra.mxu0 0
      %1488 = vmatprep.subr.bf16.mxu0 0
      %1489 = vmatpush1.bf16.msra.mxu0 0
      %1490 = vmatprep.subr.bf16.mxu0 0
      %1491 = vmatpush1.bf16.msra.mxu0 0
      %1492 = vmatprep.subr.bf16.mxu0 0
      %1493 = vmatpush1.bf16.msra.mxu0 0
      %1494 = vmatprep.subr.bf16.mxu0 0
      %1495 = vmatpush1.bf16.msra.mxu0 0
      %1496 = vmatprep.subr.bf16.mxu0 0
      %1497 = vmatpush1.bf16.msra.mxu0 0
      %1498 = vmatprep.subr.bf16.mxu0 0
      %1499 = vmatpush1.bf16.msra.mxu0 0
      %1500 = vmatprep.mubr.bf16.mxu0 0
      %1501 = vmatmul.mubr.bf16.gmra.mrb[0].mxu0 %v473
      %v1502 = vpop.f32.mrb[0].mxu0
      %v1503 = vadd.f32 %v388, %v1502
      %v1504 = vpop.f32.mrb[0].mxu0
      %v1505 = vadd.f32 %v392, %v1504
      %v1506 = vpop.f32.mrb[0].mxu0
      %v1507 = vadd.f32 %v388, %v1506
      %v1508 = vpop.f32.mrb[0].mxu0
      %v1509 = vadd.f32 %v392, %v1508
      %1510 = vmatprep.mubr.bf16.mxu0 0
      %1511 = vmatmul.mubr.bf16.gmra.mrb[0].mxu0 %v474
      %v1512 = vpop.f32.mrb[0].mxu0
      %v1513 = vadd.f32 %v388, %v1512
      %v1514 = vpop.f32.mrb[0].mxu0
      %v1515 = vadd.f32 %v392, %v1514
      %v1516 = vpop.f32.mrb[0].mxu0
      %v1517 = vadd.f32 %v388, %v1516
      %v1518 = vpop.f32.mrb[0].mxu0
      %v1519 = vadd.f32 %v392, %v1518
      %1520 = vmatprep.mubr.bf16.mxu0 0
      %1521 = vmatmul.mubr.bf16.gmra.mrb[0].mxu0 %v475
      %v1522 = vpop.f32.mrb[0].mxu0
      %v1523 = vadd.f32 %v388, %v1522
      %v1524 = vpop.f32.mrb[0].mxu0
      %v1525 = vadd.f32 %v392, %v1524
      %v1526 = vpop.f32.mrb[0].mxu0
      %v1527 = vadd.f32 %v388, %v1526
      %v1528 = vpop.f32.mrb[0].mxu0
      %v1529 = vadd.f32 %v392, %v1528
      %1530 = vmatprep.mubr.bf16.mxu0 0
      %1531 = vmatmul.mubr.bf16.gmra.mrb[0].mxu0 %v476
      %v1532 = vpop.f32.mrb[0].mxu0
      %v1533 = vadd.f32 %v388, %v1532
      %v1534 = vpop.f32.mrb[0].mxu0
      %v1535 = vadd.f32 %v392, %v1534
      %v1536 = vpop.f32.mrb[0].mxu0
      %v1537 = vadd.f32 %v388, %v1536
      %v1538 = vpop.f32.mrb[0].mxu0
      %v1539 = vadd.f32 %v392, %v1538
      %1540 = vmatprep.mubr.bf16.mxu0 0
      %1541 = vmatmul.mubr.bf16.gmra.mrb[0].mxu0 %v477
      %v1542 = vpop.f32.mrb[0].mxu0
      %v1543 = vadd.f32 %v388, %v1542
      %v1544 = vpop.f32.mrb[0].mxu0
      %v1545 = vadd.f32 %v392, %v1544
      %v1546 = vpop.f32.mrb[0].mxu0
      %v1547 = vadd.f32 %v388, %v1546
      %v1548 = vpop.f32.mrb[0].mxu0
      %v1549 = vadd.f32 %v392, %v1548
      %1550 = vmatprep.mubr.bf16.mxu0 0
      %1551 = vmatmul.mubr.bf16.gmra.mrb[0].mxu0 %v478
      %v1552 = vpop.f32.mrb[0].mxu0
      %v1553 = vadd.f32 %v388, %v1552
      %v1554 = vpop.f32.mrb[0].mxu0
      %v1555 = vadd.f32 %v392, %v1554
      %v1556 = vpop.f32.mrb[0].mxu0
      %v1557 = vadd.f32 %v388, %v1556
      %v1558 = vpop.f32.mrb[0].mxu0
      %v1559 = vadd.f32 %v392, %v1558
      %1560 = vmatprep.mubr.bf16.mxu0 0
      %1561 = vmatmul.mubr.bf16.gmra.mrb[0].mxu0 %v479
      %v1562 = vpop.f32.mrb[0].mxu0
      %v1563 = vadd.f32 %v388, %v1562
      %v1564 = vpop.f32.mrb[0].mxu0
      %v1565 = vadd.f32 %v392, %v1564
      %v1566 = vpop.f32.mrb[0].mxu0
      %v1567 = vadd.f32 %v388, %v1566
      %v1568 = vpop.f32.mrb[0].mxu0
      %v1569 = vadd.f32 %v392, %v1568
      %1570 = vmatprep.mubr.bf16.mxu0 0
      %1571 = vmatmul.mubr.bf16.gmra.mrb[0].mxu0 %v480
      %v1572 = vpop.f32.mrb[0].mxu0
      %v1573 = vadd.f32 %v388, %v1572
      %v1574 = vpop.f32.mrb[0].mxu0
      %v1575 = vadd.f32 %v392, %v1574
      %v1576 = vpop.f32.mrb[0].mxu0
      %v1577 = vadd.f32 %v388, %v1576
      %v1578 = vpop.f32.mrb[0].mxu0
      %v1579 = vadd.f32 %v392, %v1578
      %1580 = vdwg.mxu0
      %1581 = vmatprep.subr.bf16.mxu0 %v882
      %1582 = vmatpush1.bf16.msra.mxu0 %v881
      %1583 = vmatprep.subr.bf16.mxu0 %v898
      %1584 = vmatpush1.bf16.msra.mxu0 %v897
      %1585 = vmatprep.subr.bf16.mxu0 %v914
      %1586 = vmatpush1.bf16.msra.mxu0 %v913
      %1587 = vmatprep.subr.bf16.mxu0 %v930
      %1588 = vmatpush1.bf16.msra.mxu0 %v929
      %1589 = vmatprep.subr.bf16.mxu0 %v946
      %1590 = vmatpush1.bf16.msra.mxu0 %v945
      %1591 = vmatprep.subr.bf16.mxu0 %v962
      %1592 = vmatpush1.bf16.msra.mxu0 %v961
      %1593 = vmatprep.subr.bf16.mxu0 %v978
      %1594 = vmatpush1.bf16.msra.mxu0 %v977
      %1595 = vmatprep.subr.bf16.mxu0 %v994
      %1596 = vmatpush1.bf16.msra.mxu0 %v993
      %1597 = vmatprep.subr.bf16.mxu0 0
      %1598 = vmatpush1.bf16.msra.mxu0 0
      %1599 = vmatprep.subr.bf16.mxu0 0
      %1600 = vmatpush1.bf16.msra.mxu0 0
      %1601 = vmatprep.subr.bf16.mxu0 0
      %1602 = vmatpush1.bf16.msra.mxu0 0
      %1603 = vmatprep.subr.bf16.mxu0 0
      %1604 = vmatpush1.bf16.msra.mxu0 0
      %1605 = vmatprep.subr.bf16.mxu0 0
      %1606 = vmatpush1.bf16.msra.mxu0 0
      %1607 = vmatprep.subr.bf16.mxu0 0
      %1608 = vmatpush1.bf16.msra.mxu0 0
      %1609 = vmatprep.subr.bf16.mxu0 0
      %1610 = vmatpush1.bf16.msra.mxu0 0
      %1611 = vmatprep.subr.bf16.mxu0 0
      %1612 = vmatpush1.bf16.msra.mxu0 0
      %1613 = vmatprep.mubr.bf16.mxu0 0
      %1614 = vmatmul.mubr.bf16.gmra.mrb[0].mxu0 %v473
      %v1615 = vpop.f32.mrb[0].mxu0
      %v1616 = vadd.f32 %v396, %v1615
      %v1617 = vpop.f32.mrb[0].mxu0
      %v1618 = vadd.f32 %v400, %v1617
      %v1619 = vpop.f32.mrb[0].mxu0
      %v1620 = vadd.f32 %v396, %v1619
      %v1621 = vpop.f32.mrb[0].mxu0
      %v1622 = vadd.f32 %v400, %v1621
      %1623 = vmatprep.mubr.bf16.mxu0 0
      %1624 = vmatmul.mubr.bf16.gmra.mrb[0].mxu0 %v474
      %v1625 = vpop.f32.mrb[0].mxu0
      %v1626 = vadd.f32 %v396, %v1625
      %v1627 = vpop.f32.mrb[0].mxu0
      %v1628 = vadd.f32 %v400, %v1627
      %v1629 = vpop.f32.mrb[0].mxu0
      %v1630 = vadd.f32 %v396, %v1629
      %v1631 = vpop.f32.mrb[0].mxu0
      %v1632 = vadd.f32 %v400, %v1631
      %1633 = vmatprep.mubr.bf16.mxu0 0
      %1634 = vmatmul.mubr.bf16.gmra.mrb[0].mxu0 %v475
      %v1635 = vpop.f32.mrb[0].mxu0
      %v1636 = vadd.f32 %v396, %v1635
      %v1637 = vpop.f32.mrb[0].mxu0
      %v1638 = vadd.f32 %v400, %v1637
      %v1639 = vpop.f32.mrb[0].mxu0
      %v1640 = vadd.f32 %v396, %v1639
      %v1641 = vpop.f32.mrb[0].mxu0
      %v1642 = vadd.f32 %v400, %v1641
      %1643 = vmatprep.mubr.bf16.mxu0 0
      %1644 = vmatmul.mubr.bf16.gmra.mrb[0].mxu0 %v476
      %v1645 = vpop.f32.mrb[0].mxu0
      %v1646 = vadd.f32 %v396, %v1645
      %v1647 = vpop.f32.mrb[0].mxu0
      %v1648 = vadd.f32 %v400, %v1647
      %v1649 = vpop.f32.mrb[0].mxu0
      %v1650 = vadd.f32 %v396, %v1649
      %v1651 = vpop.f32.mrb[0].mxu0
      %v1652 = vadd.f32 %v400, %v1651
      %1653 = vmatprep.mubr.bf16.mxu0 0
      %1654 = vmatmul.mubr.bf16.gmra.mrb[0].mxu0 %v477
      %v1655 = vpop.f32.mrb[0].mxu0
      %v1656 = vadd.f32 %v396, %v1655
      %v1657 = vpop.f32.mrb[0].mxu0
      %v1658 = vadd.f32 %v400, %v1657
      %v1659 = vpop.f32.mrb[0].mxu0
      %v1660 = vadd.f32 %v396, %v1659
      %v1661 = vpop.f32.mrb[0].mxu0
      %v1662 = vadd.f32 %v400, %v1661
      %1663 = vmatprep.mubr.bf16.mxu0 0
      %1664 = vmatmul.mubr.bf16.gmra.mrb[0].mxu0 %v478
      %v1665 = vpop.f32.mrb[0].mxu0
      %v1666 = vadd.f32 %v396, %v1665
      %v1667 = vpop.f32.mrb[0].mxu0
      %v1668 = vadd.f32 %v400, %v1667
      %v1669 = vpop.f32.mrb[0].mxu0
      %v1670 = vadd.f32 %v396, %v1669
      %v1671 = vpop.f32.mrb[0].mxu0
      %v1672 = vadd.f32 %v400, %v1671
      %1673 = vmatprep.mubr.bf16.mxu0 0
      %1674 = vmatmul.mubr.bf16.gmra.mrb[0].mxu0 %v479
      %v1675 = vpop.f32.mrb[0].mxu0
      %v1676 = vadd.f32 %v396, %v1675
      %v1677 = vpop.f32.mrb[0].mxu0
      %v1678 = vadd.f32 %v400, %v1677
      %v1679 = vpop.f32.mrb[0].mxu0
      %v1680 = vadd.f32 %v396, %v1679
      %v1681 = vpop.f32.mrb[0].mxu0
      %v1682 = vadd.f32 %v400, %v1681
      %1683 = vmatprep.mubr.bf16.mxu0 0
      %1684 = vmatmul.mubr.bf16.gmra.mrb[0].mxu0 %v480
      %v1685 = vpop.f32.mrb[0].mxu0
      %v1686 = vadd.f32 %v396, %v1685
      %v1687 = vpop.f32.mrb[0].mxu0
      %v1688 = vadd.f32 %v400, %v1687
      %v1689 = vpop.f32.mrb[0].mxu0
      %v1690 = vadd.f32 %v396, %v1689
      %v1691 = vpop.f32.mrb[0].mxu0
      %v1692 = vadd.f32 %v400, %v1691
      %1693 = vdwg.mxu0
      %1694 = vmatprep.subr.bf16.mxu0 %v884
      %1695 = vmatpush1.bf16.msra.mxu0 %v883
      %1696 = vmatprep.subr.bf16.mxu0 %v900
      %1697 = vmatpush1.bf16.msra.mxu0 %v899
      %1698 = vmatprep.subr.bf16.mxu0 %v916
      %1699 = vmatpush1.bf16.msra.mxu0 %v915
      %1700 = vmatprep.subr.bf16.mxu0 %v932
      %1701 = vmatpush1.bf16.msra.mxu0 %v931
      %1702 = vmatprep.subr.bf16.mxu0 %v948
      %1703 = vmatpush1.bf16.msra.mxu0 %v947
      %1704 = vmatprep.subr.bf16.mxu0 %v964
      %1705 = vmatpush1.bf16.msra.mxu0 %v963
      %1706 = vmatprep.subr.bf16.mxu0 %v980
      %1707 = vmatpush1.bf16.msra.mxu0 %v979
      %1708 = vmatprep.subr.bf16.mxu0 %v996
      %1709 = vmatpush1.bf16.msra.mxu0 %v995
      %1710 = vmatprep.subr.bf16.mxu0 0
      %1711 = vmatpush1.bf16.msra.mxu0 0
      %1712 = vmatprep.subr.bf16.mxu0 0
      %1713 = vmatpush1.bf16.msra.mxu0 0
      %1714 = vmatprep.subr.bf16.mxu0 0
      %1715 = vmatpush1.bf16.msra.mxu0 0
      %1716 = vmatprep.subr.bf16.mxu0 0
      %1717 = vmatpush1.bf16.msra.mxu0 0
      %1718 = vmatprep.subr.bf16.mxu0 0
      %1719 = vmatpush1.bf16.msra.mxu0 0
      %1720 = vmatprep.subr.bf16.mxu0 0
      %1721 = vmatpush1.bf16.msra.mxu0 0
      %1722 = vmatprep.subr.bf16.mxu0 0
      %1723 = vmatpush1.bf16.msra.mxu0 0
      %1724 = vmatprep.subr.bf16.mxu0 0
      %1725 = vmatpush1.bf16.msra.mxu0 0
      %1726 = vmatprep.mubr.bf16.mxu0 0
      %1727 = vmatmul.mubr.bf16.gmra.mrb[0].mxu0 %v473
      %v1728 = vpop.f32.mrb[0].mxu0
      %v1729 = vadd.f32 %v404, %v1728
      %v1730 = vpop.f32.mrb[0].mxu0
      %v1731 = vadd.f32 %v408, %v1730
      %v1732 = vpop.f32.mrb[0].mxu0
      %v1733 = vadd.f32 %v404, %v1732
      %v1734 = vpop.f32.mrb[0].mxu0
      %v1735 = vadd.f32 %v408, %v1734
      %1736 = vmatprep.mubr.bf16.mxu0 0
      %1737 = vmatmul.mubr.bf16.gmra.mrb[0].mxu0 %v474
      %v1738 = vpop.f32.mrb[0].mxu0
      %v1739 = vadd.f32 %v404, %v1738
      %v1740 = vpop.f32.mrb[0].mxu0
      %v1741 = vadd.f32 %v408, %v1740
      %v1742 = vpop.f32.mrb[0].mxu0
      %v1743 = vadd.f32 %v404, %v1742
      %v1744 = vpop.f32.mrb[0].mxu0
      %v1745 = vadd.f32 %v408, %v1744
      %1746 = vmatprep.mubr.bf16.mxu0 0
      %1747 = vmatmul.mubr.bf16.gmra.mrb[0].mxu0 %v475
      %v1748 = vpop.f32.mrb[0].mxu0
      %v1749 = vadd.f32 %v404, %v1748
      %v1750 = vpop.f32.mrb[0].mxu0
      %v1751 = vadd.f32 %v408, %v1750
      %v1752 = vpop.f32.mrb[0].mxu0
      %v1753 = vadd.f32 %v404, %v1752
      %v1754 = vpop.f32.mrb[0].mxu0
      %v1755 = vadd.f32 %v408, %v1754
      %1756 = vmatprep.mubr.bf16.mxu0 0
      %1757 = vmatmul.mubr.bf16.gmra.mrb[0].mxu0 %v476
      %v1758 = vpop.f32.mrb[0].mxu0
      %v1759 = vadd.f32 %v404, %v1758
      %v1760 = vpop.f32.mrb[0].mxu0
      %v1761 = vadd.f32 %v408, %v1760
      %v1762 = vpop.f32.mrb[0].mxu0
      %v1763 = vadd.f32 %v404, %v1762
      %v1764 = vpop.f32.mrb[0].mxu0
      %v1765 = vadd.f32 %v408, %v1764
      %1766 = vmatprep.mubr.bf16.mxu0 0
      %1767 = vmatmul.mubr.bf16.gmra.mrb[0].mxu0 %v477
      %v1768 = vpop.f32.mrb[0].mxu0
      %v1769 = vadd.f32 %v404, %v1768
      %v1770 = vpop.f32.mrb[0].mxu0
      %v1771 = vadd.f32 %v408, %v1770
      %v1772 = vpop.f32.mrb[0].mxu0
      %v1773 = vadd.f32 %v404, %v1772
      %v1774 = vpop.f32.mrb[0].mxu0
      %v1775 = vadd.f32 %v408, %v1774
      %1776 = vmatprep.mubr.bf16.mxu0 0
      %1777 = vmatmul.mubr.bf16.gmra.mrb[0].mxu0 %v478
      %v1778 = vpop.f32.mrb[0].mxu0
      %v1779 = vadd.f32 %v404, %v1778
      %v1780 = vpop.f32.mrb[0].mxu0
      %v1781 = vadd.f32 %v408, %v1780
      %v1782 = vpop.f32.mrb[0].mxu0
      %v1783 = vadd.f32 %v404, %v1782
      %v1784 = vpop.f32.mrb[0].mxu0
      %v1785 = vadd.f32 %v408, %v1784
      %1786 = vmatprep.mubr.bf16.mxu0 0
      %1787 = vmatmul.mubr.bf16.gmra.mrb[0].mxu0 %v479
      %v1788 = vpop.f32.mrb[0].mxu0
      %v1789 = vadd.f32 %v404, %v1788
      %v1790 = vpop.f32.mrb[0].mxu0
      %v1791 = vadd.f32 %v408, %v1790
      %v1792 = vpop.f32.mrb[0].mxu0
      %v1793 = vadd.f32 %v404, %v1792
      %v1794 = vpop.f32.mrb[0].mxu0
      %v1795 = vadd.f32 %v408, %v1794
      %1796 = vmatprep.mubr.bf16.mxu0 0
      %1797 = vmatmul.mubr.bf16.gmra.mrb[0].mxu0 %v480
      %v1798 = vpop.f32.mrb[0].mxu0
      %v1799 = vadd.f32 %v404, %v1798
      %v1800 = vpop.f32.mrb[0].mxu0
      %v1801 = vadd.f32 %v408, %v1800
      %v1802 = vpop.f32.mrb[0].mxu0
      %v1803 = vadd.f32 %v404, %v1802
      %v1804 = vpop.f32.mrb[0].mxu0
      %v1805 = vadd.f32 %v408, %v1804
      %1806 = vdwg.mxu0
      %1807 = vmatprep.subr.bf16.mxu0 %v886
      %1808 = vmatpush1.bf16.msra.mxu0 %v885
      %1809 = vmatprep.subr.bf16.mxu0 %v902
      %1810 = vmatpush1.bf16.msra.mxu0 %v901
      %1811 = vmatprep.subr.bf16.mxu0 %v918
      %1812 = vmatpush1.bf16.msra.mxu0 %v917
      %1813 = vmatprep.subr.bf16.mxu0 %v934
      %1814 = vmatpush1.bf16.msra.mxu0 %v933
      %1815 = vmatprep.subr.bf16.mxu0 %v950
      %1816 = vmatpush1.bf16.msra.mxu0 %v949
      %1817 = vmatprep.subr.bf16.mxu0 %v966
      %1818 = vmatpush1.bf16.msra.mxu0 %v965
      %1819 = vmatprep.subr.bf16.mxu0 %v982
      %1820 = vmatpush1.bf16.msra.mxu0 %v981
      %1821 = vmatprep.subr.bf16.mxu0 %v998
      %1822 = vmatpush1.bf16.msra.mxu0 %v997
      %1823 = vmatprep.subr.bf16.mxu0 0
      %1824 = vmatpush1.bf16.msra.mxu0 0
      %1825 = vmatprep.subr.bf16.mxu0 0
      %1826 = vmatpush1.bf16.msra.mxu0 0
      %1827 = vmatprep.subr.bf16.mxu0 0
      %1828 = vmatpush1.bf16.msra.mxu0 0
      %1829 = vmatprep.subr.bf16.mxu0 0
      %1830 = vmatpush1.bf16.msra.mxu0 0
      %1831 = vmatprep.subr.bf16.mxu0 0
      %1832 = vmatpush1.bf16.msra.mxu0 0
      %1833 = vmatprep.subr.bf16.mxu0 0
      %1834 = vmatpush1.bf16.msra.mxu0 0
      %1835 = vmatprep.subr.bf16.mxu0 0
      %1836 = vmatpush1.bf16.msra.mxu0 0
      %1837 = vmatprep.subr.bf16.mxu0 0
      %1838 = vmatpush1.bf16.msra.mxu0 0
      %1839 = vmatprep.mubr.bf16.mxu0 0
      %1840 = vmatmul.mubr.bf16.gmra.mrb[0].mxu0 %v473
      %v1841 = vpop.f32.mrb[0].mxu0
      %v1842 = vadd.f32 %v412, %v1841
      %v1843 = vpop.f32.mrb[0].mxu0
      %v1844 = vadd.f32 %v416, %v1843
      %v1845 = vpop.f32.mrb[0].mxu0
      %v1846 = vadd.f32 %v412, %v1845
      %v1847 = vpop.f32.mrb[0].mxu0
      %v1848 = vadd.f32 %v416, %v1847
      %1849 = vmatprep.mubr.bf16.mxu0 0
      %1850 = vmatmul.mubr.bf16.gmra.mrb[0].mxu0 %v474
      %v1851 = vpop.f32.mrb[0].mxu0
      %v1852 = vadd.f32 %v412, %v1851
      %v1853 = vpop.f32.mrb[0].mxu0
      %v1854 = vadd.f32 %v416, %v1853
      %v1855 = vpop.f32.mrb[0].mxu0
      %v1856 = vadd.f32 %v412, %v1855
      %v1857 = vpop.f32.mrb[0].mxu0
      %v1858 = vadd.f32 %v416, %v1857
      %1859 = vmatprep.mubr.bf16.mxu0 0
      %1860 = vmatmul.mubr.bf16.gmra.mrb[0].mxu0 %v475
      %v1861 = vpop.f32.mrb[0].mxu0
      %v1862 = vadd.f32 %v412, %v1861
      %v1863 = vpop.f32.mrb[0].mxu0
      %v1864 = vadd.f32 %v416, %v1863
      %v1865 = vpop.f32.mrb[0].mxu0
      %v1866 = vadd.f32 %v412, %v1865
      %v1867 = vpop.f32.mrb[0].mxu0
      %v1868 = vadd.f32 %v416, %v1867
      %1869 = vmatprep.mubr.bf16.mxu0 0
      %1870 = vmatmul.mubr.bf16.gmra.mrb[0].mxu0 %v476
      %v1871 = vpop.f32.mrb[0].mxu0
      %v1872 = vadd.f32 %v412, %v1871
      %v1873 = vpop.f32.mrb[0].mxu0
      %v1874 = vadd.f32 %v416, %v1873
      %v1875 = vpop.f32.mrb[0].mxu0
      %v1876 = vadd.f32 %v412, %v1875
      %v1877 = vpop.f32.mrb[0].mxu0
      %v1878 = vadd.f32 %v416, %v1877
      %1879 = vmatprep.mubr.bf16.mxu0 0
      %1880 = vmatmul.mubr.bf16.gmra.mrb[0].mxu0 %v477
      %v1881 = vpop.f32.mrb[0].mxu0
      %v1882 = vadd.f32 %v412, %v1881
      %v1883 = vpop.f32.mrb[0].mxu0
      %v1884 = vadd.f32 %v416, %v1883
      %v1885 = vpop.f32.mrb[0].mxu0
      %v1886 = vadd.f32 %v412, %v1885
      %v1887 = vpop.f32.mrb[0].mxu0
      %v1888 = vadd.f32 %v416, %v1887
      %1889 = vmatprep.mubr.bf16.mxu0 0
      %1890 = vmatmul.mubr.bf16.gmra.mrb[0].mxu0 %v478
      %v1891 = vpop.f32.mrb[0].mxu0
      %v1892 = vadd.f32 %v412, %v1891
      %v1893 = vpop.f32.mrb[0].mxu0
      %v1894 = vadd.f32 %v416, %v1893
      %v1895 = vpop.f32.mrb[0].mxu0
      %v1896 = vadd.f32 %v412, %v1895
      %v1897 = vpop.f32.mrb[0].mxu0
      %v1898 = vadd.f32 %v416, %v1897
      %1899 = vmatprep.mubr.bf16.mxu0 0
      %1900 = vmatmul.mubr.bf16.gmra.mrb[0].mxu0 %v479
      %v1901 = vpop.f32.mrb[0].mxu0
      %v1902 = vadd.f32 %v412, %v1901
      %v1903 = vpop.f32.mrb[0].mxu0
      %v1904 = vadd.f32 %v416, %v1903
      %v1905 = vpop.f32.mrb[0].mxu0
      %v1906 = vadd.f32 %v412, %v1905
      %v1907 = vpop.f32.mrb[0].mxu0
      %v1908 = vadd.f32 %v416, %v1907
      %1909 = vmatprep.mubr.bf16.mxu0 0
      %1910 = vmatmul.mubr.bf16.gmra.mrb[0].mxu0 %v480
      %v1911 = vpop.f32.mrb[0].mxu0
      %v1912 = vadd.f32 %v412, %v1911
      %v1913 = vpop.f32.mrb[0].mxu0
      %v1914 = vadd.f32 %v416, %v1913
      %v1915 = vpop.f32.mrb[0].mxu0
      %v1916 = vadd.f32 %v412, %v1915
      %v1917 = vpop.f32.mrb[0].mxu0
      %v1918 = vadd.f32 %v416, %v1917
      %1919 = vdwg.mxu0
      %1920 = vmatprep.subr.bf16.mxu0 %v888
      %1921 = vmatpush1.bf16.msra.mxu0 %v887
      %1922 = vmatprep.subr.bf16.mxu0 %v904
      %1923 = vmatpush1.bf16.msra.mxu0 %v903
      %1924 = vmatprep.subr.bf16.mxu0 %v920
      %1925 = vmatpush1.bf16.msra.mxu0 %v919
      %1926 = vmatprep.subr.bf16.mxu0 %v936
      %1927 = vmatpush1.bf16.msra.mxu0 %v935
      %1928 = vmatprep.subr.bf16.mxu0 %v952
      %1929 = vmatpush1.bf16.msra.mxu0 %v951
      %1930 = vmatprep.subr.bf16.mxu0 %v968
      %1931 = vmatpush1.bf16.msra.mxu0 %v967
      %1932 = vmatprep.subr.bf16.mxu0 %v984
      %1933 = vmatpush1.bf16.msra.mxu0 %v983
      %1934 = vmatprep.subr.bf16.mxu0 %v1000
      %1935 = vmatpush1.bf16.msra.mxu0 %v999
      %1936 = vmatprep.subr.bf16.mxu0 0
      %1937 = vmatpush1.bf16.msra.mxu0 0
      %1938 = vmatprep.subr.bf16.mxu0 0
      %1939 = vmatpush1.bf16.msra.mxu0 0
      %1940 = vmatprep.subr.bf16.mxu0 0
      %1941 = vmatpush1.bf16.msra.mxu0 0
      %1942 = vmatprep.subr.bf16.mxu0 0
      %1943 = vmatpush1.bf16.msra.mxu0 0
      %1944 = vmatprep.subr.bf16.mxu0 0
      %1945 = vmatpush1.bf16.msra.mxu0 0
      %1946 = vmatprep.subr.bf16.mxu0 0
      %1947 = vmatpush1.bf16.msra.mxu0 0
      %1948 = vmatprep.subr.bf16.mxu0 0
      %1949 = vmatpush1.bf16.msra.mxu0 0
      %1950 = vmatprep.subr.bf16.mxu0 0
      %1951 = vmatpush1.bf16.msra.mxu0 0
      %1952 = vmatprep.mubr.bf16.mxu0 0
      %1953 = vmatmul.mubr.bf16.gmra.mrb[0].mxu0 %v473
      %v1954 = vpop.f32.mrb[0].mxu0
      %v1955 = vadd.f32 %v420, %v1954
      %v1956 = vpop.f32.mrb[0].mxu0
      %v1957 = vadd.f32 %v424, %v1956
      %v1958 = vpop.f32.mrb[0].mxu0
      %v1959 = vadd.f32 %v420, %v1958
      %v1960 = vpop.f32.mrb[0].mxu0
      %v1961 = vadd.f32 %v424, %v1960
      %1962 = vmatprep.mubr.bf16.mxu0 0
      %1963 = vmatmul.mubr.bf16.gmra.mrb[0].mxu0 %v474
      %v1964 = vpop.f32.mrb[0].mxu0
      %v1965 = vadd.f32 %v420, %v1964
      %v1966 = vpop.f32.mrb[0].mxu0
      %v1967 = vadd.f32 %v424, %v1966
      %v1968 = vpop.f32.mrb[0].mxu0
      %v1969 = vadd.f32 %v420, %v1968
      %v1970 = vpop.f32.mrb[0].mxu0
      %v1971 = vadd.f32 %v424, %v1970
      %1972 = vmatprep.mubr.bf16.mxu0 0
      %1973 = vmatmul.mubr.bf16.gmra.mrb[0].mxu0 %v475
      %v1974 = vpop.f32.mrb[0].mxu0
      %v1975 = vadd.f32 %v420, %v1974
      %v1976 = vpop.f32.mrb[0].mxu0
      %v1977 = vadd.f32 %v424, %v1976
      %v1978 = vpop.f32.mrb[0].mxu0
      %v1979 = vadd.f32 %v420, %v1978
      %v1980 = vpop.f32.mrb[0].mxu0
      %v1981 = vadd.f32 %v424, %v1980
      %1982 = vmatprep.mubr.bf16.mxu0 0
      %1983 = vmatmul.mubr.bf16.gmra.mrb[0].mxu0 %v476
      %v1984 = vpop.f32.mrb[0].mxu0
      %v1985 = vadd.f32 %v420, %v1984
      %v1986 = vpop.f32.mrb[0].mxu0
      %v1987 = vadd.f32 %v424, %v1986
      %v1988 = vpop.f32.mrb[0].mxu0
      %v1989 = vadd.f32 %v420, %v1988
      %v1990 = vpop.f32.mrb[0].mxu0
      %v1991 = vadd.f32 %v424, %v1990
      %1992 = vmatprep.mubr.bf16.mxu0 0
      %1993 = vmatmul.mubr.bf16.gmra.mrb[0].mxu0 %v477
      %v1994 = vpop.f32.mrb[0].mxu0
      %v1995 = vadd.f32 %v420, %v1994
      %v1996 = vpop.f32.mrb[0].mxu0
      %v1997 = vadd.f32 %v424, %v1996
      %v1998 = vpop.f32.mrb[0].mxu0
      %v1999 = vadd.f32 %v420, %v1998
      %v2000 = vpop.f32.mrb[0].mxu0
      %v2001 = vadd.f32 %v424, %v2000
      %2002 = vmatprep.mubr.bf16.mxu0 0
      %2003 = vmatmul.mubr.bf16.gmra.mrb[0].mxu0 %v478
      %v2004 = vpop.f32.mrb[0].mxu0
      %v2005 = vadd.f32 %v420, %v2004
      %v2006 = vpop.f32.mrb[0].mxu0
      %v2007 = vadd.f32 %v424, %v2006
      %v2008 = vpop.f32.mrb[0].mxu0
      %v2009 = vadd.f32 %v420, %v2008
      %v2010 = vpop.f32.mrb[0].mxu0
      %v2011 = vadd.f32 %v424, %v2010
      %2012 = vmatprep.mubr.bf16.mxu0 0
      %2013 = vmatmul.mubr.bf16.gmra.mrb[0].mxu0 %v479
      %v2014 = vpop.f32.mrb[0].mxu0
      %v2015 = vadd.f32 %v420, %v2014
      %v2016 = vpop.f32.mrb[0].mxu0
      %v2017 = vadd.f32 %v424, %v2016
      %v2018 = vpop.f32.mrb[0].mxu0
      %v2019 = vadd.f32 %v420, %v2018
      %v2020 = vpop.f32.mrb[0].mxu0
      %v2021 = vadd.f32 %v424, %v2020
      %2022 = vmatprep.mubr.bf16.mxu0 0
      %2023 = vmatmul.mubr.bf16.gmra.mrb[0].mxu0 %v480
      %v2024 = vpop.f32.mrb[0].mxu0
      %v2025 = vadd.f32 %v420, %v2024
      %v2026 = vpop.f32.mrb[0].mxu0
      %v2027 = vadd.f32 %v424, %v2026
      %v2028 = vpop.f32.mrb[0].mxu0
      %v2029 = vadd.f32 %v420, %v2028
      %v2030 = vpop.f32.mrb[0].mxu0
      %v2031 = vadd.f32 %v424, %v2030
      %2032 = vdwg.mxu0
      %v2033 = vmax.f32 %v1164, 0.0
      %v2034 = vmax.f32 %v1166, 0.0
      %v2035 = vmax.f32 %v1277, 0.0
      %v2036 = vmax.f32 %v1279, 0.0
      %v2037 = vmax.f32 %v1390, 0.0
      %v2038 = vmax.f32 %v1392, 0.0
      %v2039 = vmax.f32 %v1503, 0.0
      %v2040 = vmax.f32 %v1505, 0.0
      %v2041 = vmax.f32 %v1616, 0.0
      %v2042 = vmax.f32 %v1618, 0.0
      %v2043 = vmax.f32 %v1729, 0.0
      %v2044 = vmax.f32 %v1731, 0.0
      %v2045 = vmax.f32 %v1842, 0.0
      %v2046 = vmax.f32 %v1844, 0.0
      %v2047 = vmax.f32 %v1955, 0.0
      %v2048 = vmax.f32 %v1957, 0.0
      %v2049 = vmax.f32 %v1168, 0.0
      %v2050 = vmax.f32 %v1170, 0.0
      %v2051 = vmax.f32 %v1281, 0.0
      %v2052 = vmax.f32 %v1283, 0.0
      %v2053 = vmax.f32 %v1394, 0.0
      %v2054 = vmax.f32 %v1396, 0.0
      %v2055 = vmax.f32 %v1507, 0.0
      %v2056 = vmax.f32 %v1509, 0.0
      %v2057 = vmax.f32 %v1620, 0.0
      %v2058 = vmax.f32 %v1622, 0.0
      %v2059 = vmax.f32 %v1733, 0.0
      %v2060 = vmax.f32 %v1735, 0.0
      %v2061 = vmax.f32 %v1846, 0.0
      %v2062 = vmax.f32 %v1848, 0.0
      %v2063 = vmax.f32 %v1959, 0.0
      %v2064 = vmax.f32 %v1961, 0.0
      %v2065 = vmax.f32 %v1174, 0.0
      %v2066 = vmax.f32 %v1176, 0.0
      %v2067 = vmax.f32 %v1287, 0.0
      %v2068 = vmax.f32 %v1289, 0.0
      %v2069 = vmax.f32 %v1400, 0.0
      %v2070 = vmax.f32 %v1402, 0.0
      %v2071 = vmax.f32 %v1513, 0.0
      %v2072 = vmax.f32 %v1515, 0.0
      %v2073 = vmax.f32 %v1626, 0.0
      %v2074 = vmax.f32 %v1628, 0.0
      %v2075 = vmax.f32 %v1739, 0.0
      %v2076 = vmax.f32 %v1741, 0.0
      %v2077 = vmax.f32 %v1852, 0.0
      %v2078 = vmax.f32 %v1854, 0.0
      %v2079 = vmax.f32 %v1965, 0.0
      %v2080 = vmax.f32 %v1967, 0.0
      %v2081 = vmax.f32 %v1178, 0.0
      %v2082 = vmax.f32 %v1180, 0.0
      %v2083 = vmax.f32 %v1291, 0.0
      %v2084 = vmax.f32 %v1293, 0.0
      %v2085 = vmax.f32 %v1404, 0.0
      %v2086 = vmax.f32 %v1406, 0.0
      %v2087 = vmax.f32 %v1517, 0.0
      %v2088 = vmax.f32 %v1519, 0.0
      %v2089 = vmax.f32 %v1630, 0.0
      %v2090 = vmax.f32 %v1632, 0.0
      %v2091 = vmax.f32 %v1743, 0.0
      %v2092 = vmax.f32 %v1745, 0.0
      %v2093 = vmax.f32 %v1856, 0.0
      %v2094 = vmax.f32 %v1858, 0.0
      %v2095 = vmax.f32 %v1969, 0.0
      %v2096 = vmax.f32 %v1971, 0.0
      %v2097 = vmax.f32 %v1184, 0.0
      %v2098 = vmax.f32 %v1186, 0.0
      %v2099 = vmax.f32 %v1297, 0.0
      %v2100 = vmax.f32 %v1299, 0.0
      %v2101 = vmax.f32 %v1410, 0.0
      %v2102 = vmax.f32 %v1412, 0.0
      %v2103 = vmax.f32 %v1523, 0.0
      %v2104 = vmax.f32 %v1525, 0.0
      %v2105 = vmax.f32 %v1636, 0.0
      %v2106 = vmax.f32 %v1638, 0.0
      %v2107 = vmax.f32 %v1749, 0.0
      %v2108 = vmax.f32 %v1751, 0.0
      %v2109 = vmax.f32 %v1862, 0.0
      %v2110 = vmax.f32 %v1864, 0.0
      %v2111 = vmax.f32 %v1975, 0.0
      %v2112 = vmax.f32 %v1977, 0.0
      %v2113 = vmax.f32 %v1188, 0.0
      %v2114 = vmax.f32 %v1190, 0.0
      %v2115 = vmax.f32 %v1301, 0.0
      %v2116 = vmax.f32 %v1303, 0.0
      %v2117 = vmax.f32 %v1414, 0.0
      %v2118 = vmax.f32 %v1416, 0.0
      %v2119 = vmax.f32 %v1527, 0.0
      %v2120 = vmax.f32 %v1529, 0.0
      %v2121 = vmax.f32 %v1640, 0.0
      %v2122 = vmax.f32 %v1642, 0.0
      %v2123 = vmax.f32 %v1753, 0.0
      %v2124 = vmax.f32 %v1755, 0.0
      %v2125 = vmax.f32 %v1866, 0.0
      %v2126 = vmax.f32 %v1868, 0.0
      %v2127 = vmax.f32 %v1979, 0.0
      %v2128 = vmax.f32 %v1981, 0.0
      %v2129 = vmax.f32 %v1194, 0.0
      %v2130 = vmax.f32 %v1196, 0.0
      %v2131 = vmax.f32 %v1307, 0.0
      %v2132 = vmax.f32 %v1309, 0.0
      %v2133 = vmax.f32 %v1420, 0.0
      %v2134 = vmax.f32 %v1422, 0.0
      %v2135 = vmax.f32 %v1533, 0.0
      %v2136 = vmax.f32 %v1535, 0.0
      %v2137 = vmax.f32 %v1646, 0.0
      %v2138 = vmax.f32 %v1648, 0.0
      %v2139 = vmax.f32 %v1759, 0.0
      %v2140 = vmax.f32 %v1761, 0.0
      %v2141 = vmax.f32 %v1872, 0.0
      %v2142 = vmax.f32 %v1874, 0.0
      %v2143 = vmax.f32 %v1985, 0.0
      %v2144 = vmax.f32 %v1987, 0.0
      %v2145 = vmax.f32 %v1198, 0.0
      %v2146 = vmax.f32 %v1200, 0.0
      %v2147 = vmax.f32 %v1311, 0.0
      %v2148 = vmax.f32 %v1313, 0.0
      %v2149 = vmax.f32 %v1424, 0.0
      %v2150 = vmax.f32 %v1426, 0.0
      %v2151 = vmax.f32 %v1537, 0.0
      %v2152 = vmax.f32 %v1539, 0.0
      %v2153 = vmax.f32 %v1650, 0.0
      %v2154 = vmax.f32 %v1652, 0.0
      %v2155 = vmax.f32 %v1763, 0.0
      %v2156 = vmax.f32 %v1765, 0.0
      %v2157 = vmax.f32 %v1876, 0.0
      %v2158 = vmax.f32 %v1878, 0.0
      %v2159 = vmax.f32 %v1989, 0.0
      %v2160 = vmax.f32 %v1991, 0.0
      %v2161 = vmax.f32 %v1204, 0.0
      %v2162 = vmax.f32 %v1206, 0.0
      %v2163 = vmax.f32 %v1317, 0.0
      %v2164 = vmax.f32 %v1319, 0.0
      %v2165 = vmax.f32 %v1430, 0.0
      %v2166 = vmax.f32 %v1432, 0.0
      %v2167 = vmax.f32 %v1543, 0.0
      %v2168 = vmax.f32 %v1545, 0.0
      %v2169 = vmax.f32 %v1656, 0.0
      %v2170 = vmax.f32 %v1658, 0.0
      %v2171 = vmax.f32 %v1769, 0.0
      %v2172 = vmax.f32 %v1771, 0.0
      %v2173 = vmax.f32 %v1882, 0.0
      %v2174 = vmax.f32 %v1884, 0.0
      %v2175 = vmax.f32 %v1995, 0.0
      %v2176 = vmax.f32 %v1997, 0.0
      %v2177 = vmax.f32 %v1208, 0.0
      %v2178 = vmax.f32 %v1210, 0.0
      %v2179 = vmax.f32 %v1321, 0.0
      %v2180 = vmax.f32 %v1323, 0.0
      %v2181 = vmax.f32 %v1434, 0.0
      %v2182 = vmax.f32 %v1436, 0.0
      %v2183 = vmax.f32 %v1547, 0.0
      %v2184 = vmax.f32 %v1549, 0.0
      %v2185 = vmax.f32 %v1660, 0.0
      %v2186 = vmax.f32 %v1662, 0.0
      %v2187 = vmax.f32 %v1773, 0.0
      %v2188 = vmax.f32 %v1775, 0.0
      %v2189 = vmax.f32 %v1886, 0.0
      %v2190 = vmax.f32 %v1888, 0.0
      %v2191 = vmax.f32 %v1999, 0.0
      %v2192 = vmax.f32 %v2001, 0.0
      %v2193 = vmax.f32 %v1214, 0.0
      %v2194 = vmax.f32 %v1216, 0.0
      %v2195 = vmax.f32 %v1327, 0.0
      %v2196 = vmax.f32 %v1329, 0.0
      %v2197 = vmax.f32 %v1440, 0.0
      %v2198 = vmax.f32 %v1442, 0.0
      %v2199 = vmax.f32 %v1553, 0.0
      %v2200 = vmax.f32 %v1555, 0.0
      %v2201 = vmax.f32 %v1666, 0.0
      %v2202 = vmax.f32 %v1668, 0.0
      %v2203 = vmax.f32 %v1779, 0.0
      %v2204 = vmax.f32 %v1781, 0.0
      %v2205 = vmax.f32 %v1892, 0.0
      %v2206 = vmax.f32 %v1894, 0.0
      %v2207 = vmax.f32 %v2005, 0.0
      %v2208 = vmax.f32 %v2007, 0.0
      %v2209 = vmax.f32 %v1218, 0.0
      %v2210 = vmax.f32 %v1220, 0.0
      %v2211 = vmax.f32 %v1331, 0.0
      %v2212 = vmax.f32 %v1333, 0.0
      %v2213 = vmax.f32 %v1444, 0.0
      %v2214 = vmax.f32 %v1446, 0.0
      %v2215 = vmax.f32 %v1557, 0.0
      %v2216 = vmax.f32 %v1559, 0.0
      %v2217 = vmax.f32 %v1670, 0.0
      %v2218 = vmax.f32 %v1672, 0.0
      %v2219 = vmax.f32 %v1783, 0.0
      %v2220 = vmax.f32 %v1785, 0.0
      %v2221 = vmax.f32 %v1896, 0.0
      %v2222 = vmax.f32 %v1898, 0.0
      %v2223 = vmax.f32 %v2009, 0.0
      %v2224 = vmax.f32 %v2011, 0.0
      %v2225 = vmax.f32 %v1224, 0.0
      %v2226 = vmax.f32 %v1226, 0.0
      %v2227 = vmax.f32 %v1337, 0.0
      %v2228 = vmax.f32 %v1339, 0.0
      %v2229 = vmax.f32 %v1450, 0.0
      %v2230 = vmax.f32 %v1452, 0.0
      %v2231 = vmax.f32 %v1563, 0.0
      %v2232 = vmax.f32 %v1565, 0.0
      %v2233 = vmax.f32 %v1676, 0.0
      %v2234 = vmax.f32 %v1678, 0.0
      %v2235 = vmax.f32 %v1789, 0.0
      %v2236 = vmax.f32 %v1791, 0.0
      %v2237 = vmax.f32 %v1902, 0.0
      %v2238 = vmax.f32 %v1904, 0.0
      %v2239 = vmax.f32 %v2015, 0.0
      %v2240 = vmax.f32 %v2017, 0.0
      %v2241 = vmax.f32 %v1228, 0.0
      %v2242 = vmax.f32 %v1230, 0.0
      %v2243 = vmax.f32 %v1341, 0.0
      %v2244 = vmax.f32 %v1343, 0.0
      %v2245 = vmax.f32 %v1454, 0.0
      %v2246 = vmax.f32 %v1456, 0.0
      %v2247 = vmax.f32 %v1567, 0.0
      %v2248 = vmax.f32 %v1569, 0.0
      %v2249 = vmax.f32 %v1680, 0.0
      %v2250 = vmax.f32 %v1682, 0.0
      %v2251 = vmax.f32 %v1793, 0.0
      %v2252 = vmax.f32 %v1795, 0.0
      %v2253 = vmax.f32 %v1906, 0.0
      %v2254 = vmax.f32 %v1908, 0.0
      %v2255 = vmax.f32 %v2019, 0.0
      %v2256 = vmax.f32 %v2021, 0.0
      %v2257 = vmax.f32 %v1234, 0.0
      %v2258 = vmax.f32 %v1236, 0.0
      %v2259 = vmax.f32 %v1347, 0.0
      %v2260 = vmax.f32 %v1349, 0.0
      %v2261 = vmax.f32 %v1460, 0.0
      %v2262 = vmax.f32 %v1462, 0.0
      %v2263 = vmax.f32 %v1573, 0.0
      %v2264 = vmax.f32 %v1575, 0.0
      %v2265 = vmax.f32 %v1686, 0.0
      %v2266 = vmax.f32 %v1688, 0.0
      %v2267 = vmax.f32 %v1799, 0.0
      %v2268 = vmax.f32 %v1801, 0.0
      %v2269 = vmax.f32 %v1912, 0.0
      %v2270 = vmax.f32 %v1914, 0.0
      %v2271 = vmax.f32 %v2025, 0.0
      %v2272 = vmax.f32 %v2027, 0.0
      %v2273 = vmax.f32 %v1238, 0.0
      %v2274 = vmax.f32 %v1240, 0.0
      %v2275 = vmax.f32 %v1351, 0.0
      %v2276 = vmax.f32 %v1353, 0.0
      %v2277 = vmax.f32 %v1464, 0.0
      %v2278 = vmax.f32 %v1466, 0.0
      %v2279 = vmax.f32 %v1577, 0.0
      %v2280 = vmax.f32 %v1579, 0.0
      %v2281 = vmax.f32 %v1690, 0.0
      %v2282 = vmax.f32 %v1692, 0.0
      %v2283 = vmax.f32 %v1803, 0.0
      %v2284 = vmax.f32 %v1805, 0.0
      %v2285 = vmax.f32 %v1916, 0.0
      %v2286 = vmax.f32 %v1918, 0.0
      %v2287 = vmax.f32 %v2029, 0.0
      %v2288 = vmax.f32 %v2031, 0.0
      %v2289 = vpack.c.bf16 %v2049, %v2033
      %v2290 = vpack.c.bf16 %v2050, %v2034
      %v2291 = vpack.c.bf16 %v2051, %v2035
      %v2292 = vpack.c.bf16 %v2052, %v2036
      %v2293 = vpack.c.bf16 %v2053, %v2037
      %v2294 = vpack.c.bf16 %v2054, %v2038
      %v2295 = vpack.c.bf16 %v2055, %v2039
      %v2296 = vpack.c.bf16 %v2056, %v2040
      %v2297 = vpack.c.bf16 %v2057, %v2041
      %v2298 = vpack.c.bf16 %v2058, %v2042
      %v2299 = vpack.c.bf16 %v2059, %v2043
      %v2300 = vpack.c.bf16 %v2060, %v2044
      %v2301 = vpack.c.bf16 %v2061, %v2045
      %v2302 = vpack.c.bf16 %v2062, %v2046
      %v2303 = vpack.c.bf16 %v2063, %v2047
      %v2304 = vpack.c.bf16 %v2064, %v2048
      %v2305 = vpack.c.bf16 %v2081, %v2065
      %v2306 = vpack.c.bf16 %v2082, %v2066
      %v2307 = vpack.c.bf16 %v2083, %v2067
      %v2308 = vpack.c.bf16 %v2084, %v2068
      %v2309 = vpack.c.bf16 %v2085, %v2069
      %v2310 = vpack.c.bf16 %v2086, %v2070
      %v2311 = vpack.c.bf16 %v2087, %v2071
      %v2312 = vpack.c.bf16 %v2088, %v2072
      %v2313 = vpack.c.bf16 %v2089, %v2073
      %v2314 = vpack.c.bf16 %v2090, %v2074
      %v2315 = vpack.c.bf16 %v2091, %v2075
      %v2316 = vpack.c.bf16 %v2092, %v2076
      %v2317 = vpack.c.bf16 %v2093, %v2077
      %v2318 = vpack.c.bf16 %v2094, %v2078
      %v2319 = vpack.c.bf16 %v2095, %v2079
      %v2320 = vpack.c.bf16 %v2096, %v2080
      %v2321 = vpack.c.bf16 %v2113, %v2097
      %v2322 = vpack.c.bf16 %v2114, %v2098
      %v2323 = vpack.c.bf16 %v2115, %v2099
      %v2324 = vpack.c.bf16 %v2116, %v2100
      %v2325 = vpack.c.bf16 %v2117, %v2101
      %v2326 = vpack.c.bf16 %v2118, %v2102
      %v2327 = vpack.c.bf16 %v2119, %v2103
      %v2328 = vpack.c.bf16 %v2120, %v2104
      %v2329 = vpack.c.bf16 %v2121, %v2105
      %v2330 = vpack.c.bf16 %v2122, %v2106
      %v2331 = vpack.c.bf16 %v2123, %v2107
      %v2332 = vpack.c.bf16 %v2124, %v2108
      %v2333 = vpack.c.bf16 %v2125, %v2109
      %v2334 = vpack.c.bf16 %v2126, %v2110
      %v2335 = vpack.c.bf16 %v2127, %v2111
      %v2336 = vpack.c.bf16 %v2128, %v2112
      %v2337 = vpack.c.bf16 %v2145, %v2129
      %v2338 = vpack.c.bf16 %v2146, %v2130
      %v2339 = vpack.c.bf16 %v2147, %v2131
      %v2340 = vpack.c.bf16 %v2148, %v2132
      %v2341 = vpack.c.bf16 %v2149, %v2133
      %v2342 = vpack.c.bf16 %v2150, %v2134
      %v2343 = vpack.c.bf16 %v2151, %v2135
      %v2344 = vpack.c.bf16 %v2152, %v2136
      %v2345 = vpack.c.bf16 %v2153, %v2137
      %v2346 = vpack.c.bf16 %v2154, %v2138
      %v2347 = vpack.c.bf16 %v2155, %v2139
      %v2348 = vpack.c.bf16 %v2156, %v2140
      %v2349 = vpack.c.bf16 %v2157, %v2141
      %v2350 = vpack.c.bf16 %v2158, %v2142
      %v2351 = vpack.c.bf16 %v2159, %v2143
      %v2352 = vpack.c.bf16 %v2160, %v2144
      %v2353 = vpack.c.bf16 %v2177, %v2161
      %v2354 = vpack.c.bf16 %v2178, %v2162
      %v2355 = vpack.c.bf16 %v2179, %v2163
      %v2356 = vpack.c.bf16 %v2180, %v2164
      %v2357 = vpack.c.bf16 %v2181, %v2165
      %v2358 = vpack.c.bf16 %v2182, %v2166
      %v2359 = vpack.c.bf16 %v2183, %v2167
      %v2360 = vpack.c.bf16 %v2184, %v2168
      %v2361 = vpack.c.bf16 %v2185, %v2169
      %v2362 = vpack.c.bf16 %v2186, %v2170
      %v2363 = vpack.c.bf16 %v2187, %v2171
      %v2364 = vpack.c.bf16 %v2188, %v2172
      %v2365 = vpack.c.bf16 %v2189, %v2173
      %v2366 = vpack.c.bf16 %v2190, %v2174
      %v2367 = vpack.c.bf16 %v2191, %v2175
      %v2368 = vpack.c.bf16 %v2192, %v2176
      %v2369 = vpack.c.bf16 %v2209, %v2193
      %v2370 = vpack.c.bf16 %v2210, %v2194
      %v2371 = vpack.c.bf16 %v2211, %v2195
      %v2372 = vpack.c.bf16 %v2212, %v2196
      %v2373 = vpack.c.bf16 %v2213, %v2197
      %v2374 = vpack.c.bf16 %v2214, %v2198
      %v2375 = vpack.c.bf16 %v2215, %v2199
      %v2376 = vpack.c.bf16 %v2216, %v2200
      %v2377 = vpack.c.bf16 %v2217, %v2201
      %v2378 = vpack.c.bf16 %v2218, %v2202
      %v2379 = vpack.c.bf16 %v2219, %v2203
      %v2380 = vpack.c.bf16 %v2220, %v2204
      %v2381 = vpack.c.bf16 %v2221, %v2205
      %v2382 = vpack.c.bf16 %v2222, %v2206
      %v2383 = vpack.c.bf16 %v2223, %v2207
      %v2384 = vpack.c.bf16 %v2224, %v2208
      %v2385 = vpack.c.bf16 %v2241, %v2225
      %v2386 = vpack.c.bf16 %v2242, %v2226
      %v2387 = vpack.c.bf16 %v2243, %v2227
      %v2388 = vpack.c.bf16 %v2244, %v2228
      %v2389 = vpack.c.bf16 %v2245, %v2229
      %v2390 = vpack.c.bf16 %v2246, %v2230
      %v2391 = vpack.c.bf16 %v2247, %v2231
      %v2392 = vpack.c.bf16 %v2248, %v2232
      %v2393 = vpack.c.bf16 %v2249, %v2233
      %v2394 = vpack.c.bf16 %v2250, %v2234
      %v2395 = vpack.c.bf16 %v2251, %v2235
      %v2396 = vpack.c.bf16 %v2252, %v2236
      %v2397 = vpack.c.bf16 %v2253, %v2237
      %v2398 = vpack.c.bf16 %v2254, %v2238
      %v2399 = vpack.c.bf16 %v2255, %v2239
      %v2400 = vpack.c.bf16 %v2256, %v2240
      %v2401 = vpack.c.bf16 %v2273, %v2257
      %v2402 = vpack.c.bf16 %v2274, %v2258
      %v2403 = vpack.c.bf16 %v2275, %v2259
      %v2404 = vpack.c.bf16 %v2276, %v2260
      %v2405 = vpack.c.bf16 %v2277, %v2261
      %v2406 = vpack.c.bf16 %v2278, %v2262
      %v2407 = vpack.c.bf16 %v2279, %v2263
      %v2408 = vpack.c.bf16 %v2280, %v2264
      %v2409 = vpack.c.bf16 %v2281, %v2265
      %v2410 = vpack.c.bf16 %v2282, %v2266
      %v2411 = vpack.c.bf16 %v2283, %v2267
      %v2412 = vpack.c.bf16 %v2284, %v2268
      %v2413 = vpack.c.bf16 %v2285, %v2269
      %v2414 = vpack.c.bf16 %v2286, %v2270
      %v2415 = vpack.c.bf16 %v2287, %v2271
      %v2416 = vpack.c.bf16 %v2288, %v2272
      %v2545 = vunpack.c.l.b16 %v2289
      %v2546 = vunpack.c.l.b16 %v2290
      %v2547 = vunpack.c.l.b16 %v2291
      %v2548 = vunpack.c.l.b16 %v2292
      %v2549 = vunpack.c.l.b16 %v2293
      %v2550 = vunpack.c.l.b16 %v2294
      %v2551 = vunpack.c.l.b16 %v2295
      %v2552 = vunpack.c.l.b16 %v2296
      %v2553 = vunpack.c.l.b16 %v2297
      %v2554 = vunpack.c.l.b16 %v2298
      %v2555 = vunpack.c.l.b16 %v2299
      %v2556 = vunpack.c.l.b16 %v2300
      %v2557 = vunpack.c.l.b16 %v2301
      %v2558 = vunpack.c.l.b16 %v2302
      %v2559 = vunpack.c.l.b16 %v2303
      %v2560 = vunpack.c.l.b16 %v2304
      %v2561 = vunpack.c.h.b16 %v2289
      %v2562 = vunpack.c.h.b16 %v2290
      %v2563 = vunpack.c.h.b16 %v2291
      %v2564 = vunpack.c.h.b16 %v2292
      %v2565 = vunpack.c.h.b16 %v2293
      %v2566 = vunpack.c.h.b16 %v2294
      %v2567 = vunpack.c.h.b16 %v2295
      %v2568 = vunpack.c.h.b16 %v2296
      %v2569 = vunpack.c.h.b16 %v2297
      %v2570 = vunpack.c.h.b16 %v2298
      %v2571 = vunpack.c.h.b16 %v2299
      %v2572 = vunpack.c.h.b16 %v2300
      %v2573 = vunpack.c.h.b16 %v2301
      %v2574 = vunpack.c.h.b16 %v2302
      %v2575 = vunpack.c.h.b16 %v2303
      %v2576 = vunpack.c.h.b16 %v2304
      %v2577 = vunpack.c.l.b16 %v2305
      %v2578 = vunpack.c.l.b16 %v2306
      %v2579 = vunpack.c.l.b16 %v2307
      %v2580 = vunpack.c.l.b16 %v2308
      %v2581 = vunpack.c.l.b16 %v2309
      %v2582 = vunpack.c.l.b16 %v2310
      %v2583 = vunpack.c.l.b16 %v2311
      %v2584 = vunpack.c.l.b16 %v2312
      %v2585 = vunpack.c.l.b16 %v2313
      %v2586 = vunpack.c.l.b16 %v2314
      %v2587 = vunpack.c.l.b16 %v2315
      %v2588 = vunpack.c.l.b16 %v2316
      %v2589 = vunpack.c.l.b16 %v2317
      %v2590 = vunpack.c.l.b16 %v2318
      %v2591 = vunpack.c.l.b16 %v2319
      %v2592 = vunpack.c.l.b16 %v2320
      %v2593 = vunpack.c.h.b16 %v2305
      %v2594 = vunpack.c.h.b16 %v2306
      %v2595 = vunpack.c.h.b16 %v2307
      %v2596 = vunpack.c.h.b16 %v2308
      %v2597 = vunpack.c.h.b16 %v2309
      %v2598 = vunpack.c.h.b16 %v2310
      %v2599 = vunpack.c.h.b16 %v2311
      %v2600 = vunpack.c.h.b16 %v2312
      %v2601 = vunpack.c.h.b16 %v2313
      %v2602 = vunpack.c.h.b16 %v2314
      %v2603 = vunpack.c.h.b16 %v2315
      %v2604 = vunpack.c.h.b16 %v2316
      %v2605 = vunpack.c.h.b16 %v2317
      %v2606 = vunpack.c.h.b16 %v2318
      %v2607 = vunpack.c.h.b16 %v2319
      %v2608 = vunpack.c.h.b16 %v2320
      %v2609 = vunpack.c.l.b16 %v2321
      %v2610 = vunpack.c.l.b16 %v2322
      %v2611 = vunpack.c.l.b16 %v2323
      %v2612 = vunpack.c.l.b16 %v2324
      %v2613 = vunpack.c.l.b16 %v2325
      %v2614 = vunpack.c.l.b16 %v2326
      %v2615 = vunpack.c.l.b16 %v2327
      %v2616 = vunpack.c.l.b16 %v2328
      %v2617 = vunpack.c.l.b16 %v2329
      %v2618 = vunpack.c.l.b16 %v2330
      %v2619 = vunpack.c.l.b16 %v2331
      %v2620 = vunpack.c.l.b16 %v2332
      %v2621 = vunpack.c.l.b16 %v2333
      %v2622 = vunpack.c.l.b16 %v2334
      %v2623 = vunpack.c.l.b16 %v2335
      %v2624 = vunpack.c.l.b16 %v2336
      %v2625 = vunpack.c.h.b16 %v2321
      %v2626 = vunpack.c.h.b16 %v2322
      %v2627 = vunpack.c.h.b16 %v2323
      %v2628 = vunpack.c.h.b16 %v2324
      %v2629 = vunpack.c.h.b16 %v2325
      %v2630 = vunpack.c.h.b16 %v2326
      %v2631 = vunpack.c.h.b16 %v2327
      %v2632 = vunpack.c.h.b16 %v2328
      %v2633 = vunpack.c.h.b16 %v2329
      %v2634 = vunpack.c.h.b16 %v2330
      %v2635 = vunpack.c.h.b16 %v2331
      %v2636 = vunpack.c.h.b16 %v2332
      %v2637 = vunpack.c.h.b16 %v2333
      %v2638 = vunpack.c.h.b16 %v2334
      %v2639 = vunpack.c.h.b16 %v2335
      %v2640 = vunpack.c.h.b16 %v2336
      %v2641 = vunpack.c.l.b16 %v2337
      %v2642 = vunpack.c.l.b16 %v2338
      %v2643 = vunpack.c.l.b16 %v2339
      %v2644 = vunpack.c.l.b16 %v2340
      %v2645 = vunpack.c.l.b16 %v2341
      %v2646 = vunpack.c.l.b16 %v2342
      %v2647 = vunpack.c.l.b16 %v2343
      %v2648 = vunpack.c.l.b16 %v2344
      %v2649 = vunpack.c.l.b16 %v2345
      %v2650 = vunpack.c.l.b16 %v2346
      %v2651 = vunpack.c.l.b16 %v2347
      %v2652 = vunpack.c.l.b16 %v2348
      %v2653 = vunpack.c.l.b16 %v2349
      %v2654 = vunpack.c.l.b16 %v2350
      %v2655 = vunpack.c.l.b16 %v2351
      %v2656 = vunpack.c.l.b16 %v2352
      %v2657 = vunpack.c.h.b16 %v2337
      %v2658 = vunpack.c.h.b16 %v2338
      %v2659 = vunpack.c.h.b16 %v2339
      %v2660 = vunpack.c.h.b16 %v2340
      %v2661 = vunpack.c.h.b16 %v2341
      %v2662 = vunpack.c.h.b16 %v2342
      %v2663 = vunpack.c.h.b16 %v2343
      %v2664 = vunpack.c.h.b16 %v2344
      %v2665 = vunpack.c.h.b16 %v2345
      %v2666 = vunpack.c.h.b16 %v2346
      %v2667 = vunpack.c.h.b16 %v2347
      %v2668 = vunpack.c.h.b16 %v2348
      %v2669 = vunpack.c.h.b16 %v2349
      %v2670 = vunpack.c.h.b16 %v2350
      %v2671 = vunpack.c.h.b16 %v2351
      %v2672 = vunpack.c.h.b16 %v2352
      %v2673 = vunpack.c.l.b16 %v2353
      %v2674 = vunpack.c.l.b16 %v2354
      %v2675 = vunpack.c.l.b16 %v2355
      %v2676 = vunpack.c.l.b16 %v2356
      %v2677 = vunpack.c.l.b16 %v2357
      %v2678 = vunpack.c.l.b16 %v2358
      %v2679 = vunpack.c.l.b16 %v2359
      %v2680 = vunpack.c.l.b16 %v2360
      %v2681 = vunpack.c.l.b16 %v2361
      %v2682 = vunpack.c.l.b16 %v2362
      %v2683 = vunpack.c.l.b16 %v2363
      %v2684 = vunpack.c.l.b16 %v2364
      %v2685 = vunpack.c.l.b16 %v2365
      %v2686 = vunpack.c.l.b16 %v2366
      %v2687 = vunpack.c.l.b16 %v2367
      %v2688 = vunpack.c.l.b16 %v2368
      %v2689 = vunpack.c.h.b16 %v2353
      %v2690 = vunpack.c.h.b16 %v2354
      %v2691 = vunpack.c.h.b16 %v2355
      %v2692 = vunpack.c.h.b16 %v2356
      %v2693 = vunpack.c.h.b16 %v2357
      %v2694 = vunpack.c.h.b16 %v2358
      %v2695 = vunpack.c.h.b16 %v2359
      %v2696 = vunpack.c.h.b16 %v2360
      %v2697 = vunpack.c.h.b16 %v2361
      %v2698 = vunpack.c.h.b16 %v2362
      %v2699 = vunpack.c.h.b16 %v2363
      %v2700 = vunpack.c.h.b16 %v2364
      %v2701 = vunpack.c.h.b16 %v2365
      %v2702 = vunpack.c.h.b16 %v2366
      %v2703 = vunpack.c.h.b16 %v2367
      %v2704 = vunpack.c.h.b16 %v2368
      %v2705 = vunpack.c.l.b16 %v2369
      %v2706 = vunpack.c.l.b16 %v2370
      %v2707 = vunpack.c.l.b16 %v2371
      %v2708 = vunpack.c.l.b16 %v2372
      %v2709 = vunpack.c.l.b16 %v2373
      %v2710 = vunpack.c.l.b16 %v2374
      %v2711 = vunpack.c.l.b16 %v2375
      %v2712 = vunpack.c.l.b16 %v2376
      %v2713 = vunpack.c.l.b16 %v2377
      %v2714 = vunpack.c.l.b16 %v2378
      %v2715 = vunpack.c.l.b16 %v2379
      %v2716 = vunpack.c.l.b16 %v2380
      %v2717 = vunpack.c.l.b16 %v2381
      %v2718 = vunpack.c.l.b16 %v2382
      %v2719 = vunpack.c.l.b16 %v2383
      %v2720 = vunpack.c.l.b16 %v2384
      %v2721 = vunpack.c.h.b16 %v2369
      %v2722 = vunpack.c.h.b16 %v2370
      %v2723 = vunpack.c.h.b16 %v2371
      %v2724 = vunpack.c.h.b16 %v2372
      %v2725 = vunpack.c.h.b16 %v2373
      %v2726 = vunpack.c.h.b16 %v2374
      %v2727 = vunpack.c.h.b16 %v2375
      %v2728 = vunpack.c.h.b16 %v2376
      %v2729 = vunpack.c.h.b16 %v2377
      %v2730 = vunpack.c.h.b16 %v2378
      %v2731 = vunpack.c.h.b16 %v2379
      %v2732 = vunpack.c.h.b16 %v2380
      %v2733 = vunpack.c.h.b16 %v2381
      %v2734 = vunpack.c.h.b16 %v2382
      %v2735 = vunpack.c.h.b16 %v2383
      %v2736 = vunpack.c.h.b16 %v2384
      %v2737 = vunpack.c.l.b16 %v2385
      %v2738 = vunpack.c.l.b16 %v2386
      %v2739 = vunpack.c.l.b16 %v2387
      %v2740 = vunpack.c.l.b16 %v2388
      %v2741 = vunpack.c.l.b16 %v2389
      %v2742 = vunpack.c.l.b16 %v2390
      %v2743 = vunpack.c.l.b16 %v2391
      %v2744 = vunpack.c.l.b16 %v2392
      %v2745 = vunpack.c.l.b16 %v2393
      %v2746 = vunpack.c.l.b16 %v2394
      %v2747 = vunpack.c.l.b16 %v2395
      %v2748 = vunpack.c.l.b16 %v2396
      %v2749 = vunpack.c.l.b16 %v2397
      %v2750 = vunpack.c.l.b16 %v2398
      %v2751 = vunpack.c.l.b16 %v2399
      %v2752 = vunpack.c.l.b16 %v2400
      %v2753 = vunpack.c.h.b16 %v2385
      %v2754 = vunpack.c.h.b16 %v2386
      %v2755 = vunpack.c.h.b16 %v2387
      %v2756 = vunpack.c.h.b16 %v2388
      %v2757 = vunpack.c.h.b16 %v2389
      %v2758 = vunpack.c.h.b16 %v2390
      %v2759 = vunpack.c.h.b16 %v2391
      %v2760 = vunpack.c.h.b16 %v2392
      %v2761 = vunpack.c.h.b16 %v2393
      %v2762 = vunpack.c.h.b16 %v2394
      %v2763 = vunpack.c.h.b16 %v2395
      %v2764 = vunpack.c.h.b16 %v2396
      %v2765 = vunpack.c.h.b16 %v2397
      %v2766 = vunpack.c.h.b16 %v2398
      %v2767 = vunpack.c.h.b16 %v2399
      %v2768 = vunpack.c.h.b16 %v2400
      %v2769 = vunpack.c.l.b16 %v2401
      %v2770 = vunpack.c.l.b16 %v2402
      %v2771 = vunpack.c.l.b16 %v2403
      %v2772 = vunpack.c.l.b16 %v2404
      %v2773 = vunpack.c.l.b16 %v2405
      %v2774 = vunpack.c.l.b16 %v2406
      %v2775 = vunpack.c.l.b16 %v2407
      %v2776 = vunpack.c.l.b16 %v2408
      %v2777 = vunpack.c.l.b16 %v2409
      %v2778 = vunpack.c.l.b16 %v2410
      %v2779 = vunpack.c.l.b16 %v2411
      %v2780 = vunpack.c.l.b16 %v2412
      %v2781 = vunpack.c.l.b16 %v2413
      %v2782 = vunpack.c.l.b16 %v2414
      %v2783 = vunpack.c.l.b16 %v2415
      %v2784 = vunpack.c.l.b16 %v2416
      %v2785 = vunpack.c.h.b16 %v2401
      %v2786 = vunpack.c.h.b16 %v2402
      %v2787 = vunpack.c.h.b16 %v2403
      %v2788 = vunpack.c.h.b16 %v2404
      %v2789 = vunpack.c.h.b16 %v2405
      %v2790 = vunpack.c.h.b16 %v2406
      %v2791 = vunpack.c.h.b16 %v2407
      %v2792 = vunpack.c.h.b16 %v2408
      %v2793 = vunpack.c.h.b16 %v2409
      %v2794 = vunpack.c.h.b16 %v2410
      %v2795 = vunpack.c.h.b16 %v2411
      %v2796 = vunpack.c.h.b16 %v2412
      %v2797 = vunpack.c.h.b16 %v2413
      %v2798 = vunpack.c.h.b16 %v2414
      %v2799 = vunpack.c.h.b16 %v2415
      %v2800 = vunpack.c.h.b16 %v2416
      %v2801 = vpack.c.b16 %v2546, %v2545
      %v2802 = vpack.c.b16 %v2548, %v2547
      %v2803 = vpack.c.b16 %v2550, %v2549
      %v2804 = vpack.c.b16 %v2552, %v2551
      %v2805 = vpack.c.b16 %v2554, %v2553
      %v2806 = vpack.c.b16 %v2556, %v2555
      %v2807 = vpack.c.b16 %v2558, %v2557
      %v2808 = vpack.c.b16 %v2560, %v2559
      %v2809 = vpack.c.b16 %v2562, %v2561
      %v2810 = vpack.c.b16 %v2564, %v2563
      %v2811 = vpack.c.b16 %v2566, %v2565
      %v2812 = vpack.c.b16 %v2568, %v2567
      %v2813 = vpack.c.b16 %v2570, %v2569
      %v2814 = vpack.c.b16 %v2572, %v2571
      %v2815 = vpack.c.b16 %v2574, %v2573
      %v2816 = vpack.c.b16 %v2576, %v2575
      %v2817 = vpack.c.b16 %v2578, %v2577
      %v2818 = vpack.c.b16 %v2580, %v2579
      %v2819 = vpack.c.b16 %v2582, %v2581
      %v2820 = vpack.c.b16 %v2584, %v2583
      %v2821 = vpack.c.b16 %v2586, %v2585
      %v2822 = vpack.c.b16 %v2588, %v2587
      %v2823 = vpack.c.b16 %v2590, %v2589
      %v2824 = vpack.c.b16 %v2592, %v2591
      %v2825 = vpack.c.b16 %v2594, %v2593
      %v2826 = vpack.c.b16 %v2596, %v2595
      %v2827 = vpack.c.b16 %v2598, %v2597
      %v2828 = vpack.c.b16 %v2600, %v2599
      %v2829 = vpack.c.b16 %v2602, %v2601
      %v2830 = vpack.c.b16 %v2604, %v2603
      %v2831 = vpack.c.b16 %v2606, %v2605
      %v2832 = vpack.c.b16 %v2608, %v2607
      %v2833 = vpack.c.b16 %v2610, %v2609
      %v2834 = vpack.c.b16 %v2612, %v2611
      %v2835 = vpack.c.b16 %v2614, %v2613
      %v2836 = vpack.c.b16 %v2616, %v2615
      %v2837 = vpack.c.b16 %v2618, %v2617
      %v2838 = vpack.c.b16 %v2620, %v2619
      %v2839 = vpack.c.b16 %v2622, %v2621
      %v2840 = vpack.c.b16 %v2624, %v2623
      %v2841 = vpack.c.b16 %v2626, %v2625
      %v2842 = vpack.c.b16 %v2628, %v2627
      %v2843 = vpack.c.b16 %v2630, %v2629
      %v2844 = vpack.c.b16 %v2632, %v2631
      %v2845 = vpack.c.b16 %v2634, %v2633
      %v2846 = vpack.c.b16 %v2636, %v2635
      %v2847 = vpack.c.b16 %v2638, %v2637
      %v2848 = vpack.c.b16 %v2640, %v2639
      %v2849 = vpack.c.b16 %v2642, %v2641
      %v2850 = vpack.c.b16 %v2644, %v2643
      %v2851 = vpack.c.b16 %v2646, %v2645
      %v2852 = vpack.c.b16 %v2648, %v2647
      %v2853 = vpack.c.b16 %v2650, %v2649
      %v2854 = vpack.c.b16 %v2652, %v2651
      %v2855 = vpack.c.b16 %v2654, %v2653
      %v2856 = vpack.c.b16 %v2656, %v2655
      %v2857 = vpack.c.b16 %v2658, %v2657
      %v2858 = vpack.c.b16 %v2660, %v2659
      %v2859 = vpack.c.b16 %v2662, %v2661
      %v2860 = vpack.c.b16 %v2664, %v2663
      %v2861 = vpack.c.b16 %v2666, %v2665
      %v2862 = vpack.c.b16 %v2668, %v2667
      %v2863 = vpack.c.b16 %v2670, %v2669
      %v2864 = vpack.c.b16 %v2672, %v2671
      %v2865 = vpack.c.b16 %v2674, %v2673
      %v2866 = vpack.c.b16 %v2676, %v2675
      %v2867 = vpack.c.b16 %v2678, %v2677
      %v2868 = vpack.c.b16 %v2680, %v2679
      %v2869 = vpack.c.b16 %v2682, %v2681
      %v2870 = vpack.c.b16 %v2684, %v2683
      %v2871 = vpack.c.b16 %v2686, %v2685
      %v2872 = vpack.c.b16 %v2688, %v2687
      %v2873 = vpack.c.b16 %v2690, %v2689
      %v2874 = vpack.c.b16 %v2692, %v2691
      %v2875 = vpack.c.b16 %v2694, %v2693
      %v2876 = vpack.c.b16 %v2696, %v2695
      %v2877 = vpack.c.b16 %v2698, %v2697
      %v2878 = vpack.c.b16 %v2700, %v2699
      %v2879 = vpack.c.b16 %v2702, %v2701
      %v2880 = vpack.c.b16 %v2704, %v2703
      %v2881 = vpack.c.b16 %v2706, %v2705
      %v2882 = vpack.c.b16 %v2708, %v2707
      %v2883 = vpack.c.b16 %v2710, %v2709
      %v2884 = vpack.c.b16 %v2712, %v2711
      %v2885 = vpack.c.b16 %v2714, %v2713
      %v2886 = vpack.c.b16 %v2716, %v2715
      %v2887 = vpack.c.b16 %v2718, %v2717
      %v2888 = vpack.c.b16 %v2720, %v2719
      %v2889 = vpack.c.b16 %v2722, %v2721
      %v2890 = vpack.c.b16 %v2724, %v2723
      %v2891 = vpack.c.b16 %v2726, %v2725
      %v2892 = vpack.c.b16 %v2728, %v2727
      %v2893 = vpack.c.b16 %v2730, %v2729
      %v2894 = vpack.c.b16 %v2732, %v2731
      %v2895 = vpack.c.b16 %v2734, %v2733
      %v2896 = vpack.c.b16 %v2736, %v2735
      %v2897 = vpack.c.b16 %v2738, %v2737
      %v2898 = vpack.c.b16 %v2740, %v2739
      %v2899 = vpack.c.b16 %v2742, %v2741
      %v2900 = vpack.c.b16 %v2744, %v2743
      %v2901 = vpack.c.b16 %v2746, %v2745
      %v2902 = vpack.c.b16 %v2748, %v2747
      %v2903 = vpack.c.b16 %v2750, %v2749
      %v2904 = vpack.c.b16 %v2752, %v2751
      %v2905 = vpack.c.b16 %v2754, %v2753
      %v2906 = vpack.c.b16 %v2756, %v2755
      %v2907 = vpack.c.b16 %v2758, %v2757
      %v2908 = vpack.c.b16 %v2760, %v2759
      %v2909 = vpack.c.b16 %v2762, %v2761
      %v2910 = vpack.c.b16 %v2764, %v2763
      %v2911 = vpack.c.b16 %v2766, %v2765
      %v2912 = vpack.c.b16 %v2768, %v2767
      %v2913 = vpack.c.b16 %v2770, %v2769
      %v2914 = vpack.c.b16 %v2772, %v2771
      %v2915 = vpack.c.b16 %v2774, %v2773
      %v2916 = vpack.c.b16 %v2776, %v2775
      %v2917 = vpack.c.b16 %v2778, %v2777
      %v2918 = vpack.c.b16 %v2780, %v2779
      %v2919 = vpack.c.b16 %v2782, %v2781
      %v2920 = vpack.c.b16 %v2784, %v2783
      %v2921 = vpack.c.b16 %v2786, %v2785
      %v2922 = vpack.c.b16 %v2788, %v2787
      %v2923 = vpack.c.b16 %v2790, %v2789
      %v2924 = vpack.c.b16 %v2792, %v2791
      %v2925 = vpack.c.b16 %v2794, %v2793
      %v2926 = vpack.c.b16 %v2796, %v2795
      %v2927 = vpack.c.b16 %v2798, %v2797
      %v2928 = vpack.c.b16 %v2800, %v2799
      %3057 = vst [vmem:[%s210] sm:$0xff] %v2801
      %3058 = vst [vmem:[%s210 + $0x8] sm:$0xff] %v2802
      %3059 = vst [vmem:[%s210 + $0x10] sm:$0xff] %v2803
      %3060 = vst [vmem:[%s210 + $0x18] sm:$0xff] %v2804
      %3061 = vst [vmem:[%s210 + $0x20] sm:$0xff] %v2805
      %3062 = vst [vmem:[%s210 + $0x28] sm:$0xff] %v2806
      %3063 = vst [vmem:[%s210 + $0x30] sm:$0xff] %v2807
      %3064 = vst [vmem:[%s210 + $0x38] sm:$0xff] %v2808
      %3065 = vst [vmem:[%s210 + $0x40] sm:$0xff] %v2809
      %3066 = vst [vmem:[%s210 + $0x48] sm:$0xff] %v2810
      %3067 = vst [vmem:[%s210 + $0x50] sm:$0xff] %v2811
      %3068 = vst [vmem:[%s210 + $0x58] sm:$0xff] %v2812
      %3069 = vst [vmem:[%s210 + $0x60] sm:$0xff] %v2813
      %3070 = vst [vmem:[%s210 + $0x68] sm:$0xff] %v2814
      %3071 = vst [vmem:[%s210 + $0x70] sm:$0xff] %v2815
      %3072 = vst [vmem:[%s210 + $0x78] sm:$0xff] %v2816
      %3073 = vst [vmem:[%s210 + $0x80] sm:$0xff] %v2817
      %3074 = vst [vmem:[%s210 + $0x88] sm:$0xff] %v2818
      %3075 = vst [vmem:[%s210 + $0x90] sm:$0xff] %v2819
      %3076 = vst [vmem:[%s210 + $0x98] sm:$0xff] %v2820
      %3077 = vst [vmem:[%s210 + $0xa0] sm:$0xff] %v2821
      %3078 = vst [vmem:[%s210 + $0xa8] sm:$0xff] %v2822
      %3079 = vst [vmem:[%s210 + $0xb0] sm:$0xff] %v2823
      %3080 = vst [vmem:[%s210 + $0xb8] sm:$0xff] %v2824
      %3081 = vst [vmem:[%s210 + $0xc0] sm:$0xff] %v2825
      %3082 = vst [vmem:[%s210 + $0xc8] sm:$0xff] %v2826
      %3083 = vst [vmem:[%s210 + $0xd0] sm:$0xff] %v2827
      %3084 = vst [vmem:[%s210 + $0xd8] sm:$0xff] %v2828
      %3085 = vst [vmem:[%s210 + $0xe0] sm:$0xff] %v2829
      %3086 = vst [vmem:[%s210 + $0xe8] sm:$0xff] %v2830
      %3087 = vst [vmem:[%s210 + $0xf0] sm:$0xff] %v2831
      %3088 = vst [vmem:[%s210 + $0xf8] sm:$0xff] %v2832
      %3089 = vst [vmem:[%s210 + $0x100] sm:$0xff] %v2833
      %3090 = vst [vmem:[%s210 + $0x108] sm:$0xff] %v2834
      %3091 = vst [vmem:[%s210 + $0x110] sm:$0xff] %v2835
      %3092 = vst [vmem:[%s210 + $0x118] sm:$0xff] %v2836
      %3093 = vst [vmem:[%s210 + $0x120] sm:$0xff] %v2837
      %3094 = vst [vmem:[%s210 + $0x128] sm:$0xff] %v2838
      %3095 = vst [vmem:[%s210 + $0x130] sm:$0xff] %v2839
      %3096 = vst [vmem:[%s210 + $0x138] sm:$0xff] %v2840
      %3097 = vst [vmem:[%s210 + $0x140] sm:$0xff] %v2841
      %3098 = vst [vmem:[%s210 + $0x148] sm:$0xff] %v2842
      %3099 = vst [vmem:[%s210 + $0x150] sm:$0xff] %v2843
      %3100 = vst [vmem:[%s210 + $0x158] sm:$0xff] %v2844
      %3101 = vst [vmem:[%s210 + $0x160] sm:$0xff] %v2845
      %3102 = vst [vmem:[%s210 + $0x168] sm:$0xff] %v2846
      %3103 = vst [vmem:[%s210 + $0x170] sm:$0xff] %v2847
      %3104 = vst [vmem:[%s210 + $0x178] sm:$0xff] %v2848
      %3105 = vst [vmem:[%s210 + $0x180] sm:$0xff] %v2849
      %3106 = vst [vmem:[%s210 + $0x188] sm:$0xff] %v2850
      %3107 = vst [vmem:[%s210 + $0x190] sm:$0xff] %v2851
      %3108 = vst [vmem:[%s210 + $0x198] sm:$0xff] %v2852
      %3109 = vst [vmem:[%s210 + $0x1a0] sm:$0xff] %v2853
      %3110 = vst [vmem:[%s210 + $0x1a8] sm:$0xff] %v2854
      %3111 = vst [vmem:[%s210 + $0x1b0] sm:$0xff] %v2855
      %3112 = vst [vmem:[%s210 + $0x1b8] sm:$0xff] %v2856
      %3113 = vst [vmem:[%s210 + $0x1c0] sm:$0xff] %v2857
      %3114 = vst [vmem:[%s210 + $0x1c8] sm:$0xff] %v2858
      %3115 = vst [vmem:[%s210 + $0x1d0] sm:$0xff] %v2859
      %3116 = vst [vmem:[%s210 + $0x1d8] sm:$0xff] %v2860
      %3117 = vst [vmem:[%s210 + $0x1e0] sm:$0xff] %v2861
      %3118 = vst [vmem:[%s210 + $0x1e8] sm:$0xff] %v2862
      %3119 = vst [vmem:[%s210 + $0x1f0] sm:$0xff] %v2863
      %3120 = vst [vmem:[%s210 + $0x1f8] sm:$0xff] %v2864
      %3121 = vst [vmem:[%s210 + $0x200] sm:$0xff] %v2865
      %3122 = vst [vmem:[%s210 + $0x208] sm:$0xff] %v2866
      %3123 = vst [vmem:[%s210 + $0x210] sm:$0xff] %v2867
      %3124 = vst [vmem:[%s210 + $0x218] sm:$0xff] %v2868
      %3125 = vst [vmem:[%s210 + $0x220] sm:$0xff] %v2869
      %3126 = vst [vmem:[%s210 + $0x228] sm:$0xff] %v2870
      %3127 = vst [vmem:[%s210 + $0x230] sm:$0xff] %v2871
      %3128 = vst [vmem:[%s210 + $0x238] sm:$0xff] %v2872
      %3129 = vst [vmem:[%s210 + $0x240] sm:$0xff] %v2873
      %3130 = vst [vmem:[%s210 + $0x248] sm:$0xff] %v2874
      %3131 = vst [vmem:[%s210 + $0x250] sm:$0xff] %v2875
      %3132 = vst [vmem:[%s210 + $0x258] sm:$0xff] %v2876
      %3133 = vst [vmem:[%s210 + $0x260] sm:$0xff] %v2877
      %3134 = vst [vmem:[%s210 + $0x268] sm:$0xff] %v2878
      %3135 = vst [vmem:[%s210 + $0x270] sm:$0xff] %v2879
      %3136 = vst [vmem:[%s210 + $0x278] sm:$0xff] %v2880
      %3137 = vst [vmem:[%s210 + $0x280] sm:$0xff] %v2881
      %3138 = vst [vmem:[%s210 + $0x288] sm:$0xff] %v2882
      %3139 = vst [vmem:[%s210 + $0x290] sm:$0xff] %v2883
      %3140 = vst [vmem:[%s210 + $0x298] sm:$0xff] %v2884
      %3141 = vst [vmem:[%s210 + $0x2a0] sm:$0xff] %v2885
      %3142 = vst [vmem:[%s210 + $0x2a8] sm:$0xff] %v2886
      %3143 = vst [vmem:[%s210 + $0x2b0] sm:$0xff] %v2887
      %3144 = vst [vmem:[%s210 + $0x2b8] sm:$0xff] %v2888
      %3145 = vst [vmem:[%s210 + $0x2c0] sm:$0xff] %v2889
      %3146 = vst [vmem:[%s210 + $0x2c8] sm:$0xff] %v2890
      %3147 = vst [vmem:[%s210 + $0x2d0] sm:$0xff] %v2891
      %3148 = vst [vmem:[%s210 + $0x2d8] sm:$0xff] %v2892
      %3149 = vst [vmem:[%s210 + $0x2e0] sm:$0xff] %v2893
      %3150 = vst [vmem:[%s210 + $0x2e8] sm:$0xff] %v2894
      %3151 = vst [vmem:[%s210 + $0x2f0] sm:$0xff] %v2895
      %3152 = vst [vmem:[%s210 + $0x2f8] sm:$0xff] %v2896
      %3153 = vst [vmem:[%s210 + $0x300] sm:$0xff] %v2897
      %3154 = vst [vmem:[%s210 + $0x308] sm:$0xff] %v2898
      %3155 = vst [vmem:[%s210 + $0x310] sm:$0xff] %v2899
      %3156 = vst [vmem:[%s210 + $0x318] sm:$0xff] %v2900
      %3157 = vst [vmem:[%s210 + $0x320] sm:$0xff] %v2901
      %3158 = vst [vmem:[%s210 + $0x328] sm:$0xff] %v2902
      %3159 = vst [vmem:[%s210 + $0x330] sm:$0xff] %v2903
      %3160 = vst [vmem:[%s210 + $0x338] sm:$0xff] %v2904
      %3161 = vst [vmem:[%s210 + $0x340] sm:$0xff] %v2905
      %3162 = vst [vmem:[%s210 + $0x348] sm:$0xff] %v2906
      %3163 = vst [vmem:[%s210 + $0x350] sm:$0xff] %v2907
      %3164 = vst [vmem:[%s210 + $0x358] sm:$0xff] %v2908
      %3165 = vst [vmem:[%s210 + $0x360] sm:$0xff] %v2909
      %3166 = vst [vmem:[%s210 + $0x368] sm:$0xff] %v2910
      %3167 = vst [vmem:[%s210 + $0x370] sm:$0xff] %v2911
      %3168 = vst [vmem:[%s210 + $0x378] sm:$0xff] %v2912
      %3169 = vst [vmem:[%s210 + $0x380] sm:$0xff] %v2913
      %3170 = vst [vmem:[%s210 + $0x388] sm:$0xff] %v2914
      %3171 = vst [vmem:[%s210 + $0x390] sm:$0xff] %v2915
      %3172 = vst [vmem:[%s210 + $0x398] sm:$0xff] %v2916
      %3173 = vst [vmem:[%s210 + $0x3a0] sm:$0xff] %v2917
      %3174 = vst [vmem:[%s210 + $0x3a8] sm:$0xff] %v2918
      %3175 = vst [vmem:[%s210 + $0x3b0] sm:$0xff] %v2919
      %3176 = vst [vmem:[%s210 + $0x3b8] sm:$0xff] %v2920
      %3177 = vst [vmem:[%s210 + $0x3c0] sm:$0xff] %v2921
      %3178 = vst [vmem:[%s210 + $0x3c8] sm:$0xff] %v2922
      %3179 = vst [vmem:[%s210 + $0x3d0] sm:$0xff] %v2923
      %3180 = vst [vmem:[%s210 + $0x3d8] sm:$0xff] %v2924
      %3181 = vst [vmem:[%s210 + $0x3e0] sm:$0xff] %v2925
      %3182 = vst [vmem:[%s210 + $0x3e8] sm:$0xff] %v2926
      %3183 = vst [vmem:[%s210 + $0x3f0] sm:$0xff] %v2927
      %3184 = vst [vmem:[%s210 + $0x3f8] sm:$0xff] %v2928
      %s3185 = smul.u32 16, %s19
      %p3186 = scmp.lt.s32.totalorder %s18, 1
      %s3187 = scalar_select %p3186, %s18, 1
      %p3188 = scmp.lt.s32.totalorder %s3185, 31
      %s3189 = scalar_select %p3188, %s3185, 31
      %s3190 = smul.addr %s3189, 16
      %s3191 = smul.addr %s3187, 512
      %s3192 = sadd.s32 %s3190, %s3191
      %s3193 = smul.addr %s3192, 4
      %s3194 = scalar_lea.vmem %s3, %s3193
      // Predicated region
      $region33: #{mask_up_block_forward.1} parent=31 // pred_check
        %p3195 = pneg %p116
      $region34: #{mask_up_block_forward.1} parent=31 // pred_check_branch
        %3197 = sbr.rel (%p3195) target = $region36
      $region35: #{mask_up_block_forward.1} parent=31 // pred_region
        %s3198 = smul.u32 16, %s19
      $region36: #{mask_up_block_forward.1} parent=31 // pred_fallthru
        _
    $region32: #{mask_up_block_forward.1} parent=5 // pred_fallthru
      _
    %p3199 = scmp.le.s32.totalorder 2, %s9
    // Predicated region
    $region37: #{mask_up_block_forward.1} parent=5 // pred_check
      %p3200 = pneg %p3199
    $region38: #{mask_up_block_forward.1} parent=5 // pred_check_branch
      %3202 = sbr.rel (%p3200) target = $region40
    $region39: #{mask_up_block_forward.1} parent=5 // pred_region
      %s3203 = ssub.s32 %s9, 2
      // Predicated region
      $region41: #{mask_up_block_forward.1} parent=39 // pred_check
        %p3204 = pneg %p122
      $region42: #{mask_up_block_forward.1} parent=39 // pred_check_branch
        %3206 = sbr.rel (%p3204) target = $region44
      $region43: #{mask_up_block_forward.1} parent=39 // pred_region
        %s3207 = smul.u32 16, %s21
        %p3208 = scmp.lt.s32.totalorder %s20, 1
        %s3209 = scalar_select %p3208, %s20, 1
        %p3210 = scmp.lt.s32.totalorder %s3207, 31
        %s3211 = scalar_select %p3210, %s3207, 31
        %s3212 = smul.addr %s3211, 16
        %s3213 = smul.addr %s3209, 512
        %s3214 = sadd.s32 %s3212, %s3213
        %s3215 = smul.addr %s3214, 4
        %s3216 = scalar_lea.vmem %s3, %s3215
      $region44: #{mask_up_block_forward.1} parent=39 // pred_fallthru
        _
    $region40: #{mask_up_block_forward.1} parent=5 // pred_fallthru
      _
  $region6: #{mask_up_block_forward.1} parent=0 // loop_footer
    %s13 = sadd.s32 1, %s9
  $region7: #{mask_up_block_forward.1} parent=0 // loop_footer_branch
    %8 = sbr.rel target = $region3
  $region8: #{mask_up_block_forward.1} parent=0 // loop_exit
    _

</llo_original>
